<compile_context>
chip_gen: v6e
topology: v6e:2x2x1
jax: 0.10.0
libtpu: 0.0.40
codegen_flags: <defaults>
</compile_context>

<pallas_src>
import functools
import math

import jax
import jax.numpy as jnp
from jax import lax
from jax.experimental import pallas as pl
from jax.experimental.pallas import tpu as pltpu


# --------------------------- tile-size helpers -------------------------------

def _sublane_tile(n, cap):
    """Tile for a second-minor dim: multiple of 8 dividing n (<= cap), else n."""
    if n <= cap:
        return n
    t = (cap // 8) * 8
    while t >= 8:
        if n % t == 0:
            return t
        t -= 8
    return n


def _lane_tile(n, cap):
    """Tile for a minor dim: multiple of 128 dividing n (<= cap), else n."""
    if n <= cap:
        return n
    t = (cap // 128) * 128
    while t >= 128:
        if n % t == 0:
            return t
        t -= 128
    return n


# ------------------------------ LayerNorm ------------------------------------

def _layer_norm_kernel(x_ref, g_ref, b_ref, o_ref, *, eps):
    x = x_ref[...].astype(jnp.float32)                       # (tm, D)
    mean = jnp.mean(x, axis=-1, keepdims=True)
    xc = x - mean
    var = jnp.mean(xc * xc, axis=-1, keepdims=True)
    inv = lax.rsqrt(var + eps)                                # EUP
    y = xc * inv * g_ref[...].astype(jnp.float32) + b_ref[...].astype(jnp.float32)
    o_ref[...] = y.astype(o_ref.dtype)


def pallas_layer_norm(x, gamma, beta, *, eps=1e-5):
    """LayerNorm over the last dim, matching torch.nn.LayerNorm (eps=1e-5)."""
    orig_shape = x.shape
    D = orig_shape[-1]
    x2d = x.reshape(-1, D)
    M = x2d.shape[0]
    tm = _sublane_tile(M, 512)
    kernel = functools.partial(_layer_norm_kernel, eps=eps)
    out = pl.pallas_call(
        kernel,
        out_shape=jax.ShapeDtypeStruct((M, D), x.dtype),
        grid_spec=pltpu.PrefetchScalarGridSpec(
            num_scalar_prefetch=0,
            grid=(M // tm,),
            in_specs=[
                pl.BlockSpec((tm, D), lambda i: (i, 0)),
                pl.BlockSpec((1, D), lambda i: (0, 0)),
                pl.BlockSpec((1, D), lambda i: (0, 0)),
            ],
            out_specs=pl.BlockSpec((tm, D), lambda i: (i, 0)),
        ),
        compiler_params=pltpu.CompilerParams(dimension_semantics=("parallel",)),
    )(x2d, gamma.reshape(1, D), beta.reshape(1, D))
    return out.reshape(orig_shape)


# --------------------------- tiled linear (matmul) ----------------------------

def _linear_kernel(x_ref, w_ref, b_ref, o_ref, acc_ref):
    @pl.when(pl.program_id(2) == 0)
    def _():
        acc_ref[...] = jnp.zeros_like(acc_ref)

    acc_ref[...] += jnp.dot(x_ref[...], w_ref[...],
                            preferred_element_type=jnp.float32)

    @pl.when(pl.program_id(2) == pl.num_programs(2) - 1)
    def _():
        o_ref[...] = (acc_ref[...] + b_ref[...].astype(jnp.float32)
                      ).astype(o_ref.dtype)


def _linear_residual_kernel(x_ref, w_ref, b_ref, r_ref, o_ref, acc_ref):
    @pl.when(pl.program_id(2) == 0)
    def _():
        acc_ref[...] = jnp.zeros_like(acc_ref)

    acc_ref[...] += jnp.dot(x_ref[...], w_ref[...],
                            preferred_element_type=jnp.float32)

    @pl.when(pl.program_id(2) == pl.num_programs(2) - 1)
    def _():
        o_ref[...] = (acc_ref[...] + b_ref[...].astype(jnp.float32)
                      + r_ref[...].astype(jnp.float32)).astype(o_ref.dtype)


def pallas_linear(x2d, w, b, residual2d=None):
    """y = x2d @ w + b (+ residual2d).  w is stored pre-transposed as (K, N)."""
    M, K = x2d.shape
    N = w.shape[1]
    tm = _sublane_tile(M, 512)
    tn = _lane_tile(N, 512)
    tk = _lane_tile(K, 512)
    grid = (M // tm, N // tn, K // tk)
    b2d = b.reshape(1, N)

    in_specs = [
        pl.BlockSpec((tm, tk), lambda i, j, k: (i, k)),
        pl.BlockSpec((tk, tn), lambda i, j, k: (k, j)),
        pl.BlockSpec((1, tn), lambda i, j, k: (0, j)),
    ]
    args = [x2d, w, b2d]
    kernel = _linear_kernel
    if residual2d is not None:
        in_specs.append(pl.BlockSpec((tm, tn), lambda i, j, k: (i, j)))
        args.append(residual2d)
        kernel = _linear_residual_kernel

    return pl.pallas_call(
        kernel,
        out_shape=jax.ShapeDtypeStruct((M, N), x2d.dtype),
        grid_spec=pltpu.PrefetchScalarGridSpec(
            num_scalar_prefetch=0,
            grid=grid,
            in_specs=in_specs,
            out_specs=pl.BlockSpec((tm, tn), lambda i, j, k: (i, j)),
            scratch_shapes=[pltpu.VMEM((tm, tn), jnp.float32)],
        ),
        compiler_params=pltpu.CompilerParams(
            dimension_semantics=("parallel", "parallel", "arbitrary")),
    )(*args)


def pallas_qkv_proj(x2d, w_qkv, b_qkv):
    """Fused Q/K/V projection: one pass over x2d, output packed as (3, M, D).

    w_qkv: (3, D, D) pre-transposed (in, out); b_qkv: (3, 1, D).
    """
    M, K = x2d.shape
    D = w_qkv.shape[-1]
    tm = _sublane_tile(M, 512)
    tk = _lane_tile(K, 512)
    grid = (M // tm, 3, K // tk)

    return pl.pallas_call(
        _linear_kernel,
        out_shape=jax.ShapeDtypeStruct((3, M, D), x2d.dtype),
        grid_spec=pltpu.PrefetchScalarGridSpec(
            num_scalar_prefetch=0,
            grid=grid,
            in_specs=[
                pl.BlockSpec((tm, tk), lambda i, j, k: (i, k)),
                pl.BlockSpec((None, tk, D), lambda i, j, k: (j, k, 0)),
                pl.BlockSpec((None, 1, D), lambda i, j, k: (j, 0, 0)),
            ],
            out_specs=pl.BlockSpec((None, tm, D), lambda i, j, k: (j, i, 0)),
            scratch_shapes=[pltpu.VMEM((tm, D), jnp.float32)],
        ),
        compiler_params=pltpu.CompilerParams(
            dimension_semantics=("parallel", "parallel", "arbitrary")),
    )(x2d, w_qkv, b_qkv)


# ----------------------- flash-style multi-head attention ---------------------

def _mha_flash_kernel(q_ref, k_ref, v_ref, bias_ref, o_ref,
                      m_sc, l_sc, acc_sc, *, num_heads, scale):
    ki = pl.program_id(2)

    @pl.when(ki == 0)
    def _():
        m_sc[...] = jnp.full(m_sc.shape, -jnp.inf, dtype=m_sc.dtype)
        l_sc[...] = jnp.zeros_like(l_sc)
        acc_sc[...] = jnp.zeros_like(acc_sc)

    d_model = q_ref.shape[-1]
    d_k = d_model // num_heads

    bias = bias_ref[...].astype(jnp.float32)      # (tq, tk) additive mask (0 / -1e9)
    q = q_ref[...] * scale                        # fold 1/sqrt(d_k) into q
    k = k_ref[...]
    v = v_ref[...]

    for h in range(num_heads):                    # small, statically unrolled
        lo, hi = h * d_k, (h + 1) * d_k
        qh = q[:, lo:hi]                          # (tq, d_k)
        kh = k[:, lo:hi]                          # (tk, d_k)
        vh = v[:, lo:hi]                          # (tk, d_k)

        # contract d_k of both operands directly — no k.T / XLU transpose
        s = lax.dot_general(qh, kh, (((1,), (1,)), ((), ())),
                            preferred_element_type=jnp.float32)       # (tq, tk)
        s = s + bias

        m_prev = m_sc[:, h:h + 1]
        l_prev = l_sc[:, h:h + 1]
        m_new = jnp.maximum(m_prev, jnp.max(s, axis=-1, keepdims=True))
        alpha = jnp.exp(m_prev - m_new)
        p = jnp.exp(s - m_new)
        l_sc[:, h:h + 1] = alpha * l_prev + jnp.sum(p, axis=-1, keepdims=True)
        m_sc[:, h:h + 1] = m_new

        pv = jnp.dot(p.astype(vh.dtype), vh,
                     preferred_element_type=jnp.float32)               # (tq, d_k)
        acc_sc[:, lo:hi] = alpha * acc_sc[:, lo:hi] + pv

    @pl.when(ki == pl.num_programs(2) - 1)
    def _():
        inv_l = pl.reciprocal(l_sc[...], approx=True)                  # (tq, H), EUP
        for h in range(num_heads):
            lo, hi = h * d_k, (h + 1) * d_k
            o_ref[:, lo:hi] = (acc_sc[:, lo:hi] * inv_l[:, h:h + 1]
                               ).astype(o_ref.dtype)


def pallas_mha_from_qkv(qkv, mask_bias, *, num_heads):
    """qkv: (3, B, S, D) packed q/k/v; mask_bias: (B, S, S) additive f32.

    Returns the concatenated per-head attention output, (B, S, D), lane-dense.
    """
    _, B, S, D = qkv.shape
    d_k = D // num_heads
    tq = _sublane_tile(S, 256)
    tk = _lane_tile(S, 512)     # tk is the minor dim of the mask-bias block
    grid = (B, S // tq, S // tk)
    scale = 1.0 / math.sqrt(d_k)
    kernel = functools.partial(_mha_flash_kernel, num_heads=num_heads, scale=scale)

    return pl.pallas_call(
        kernel,
        out_shape=jax.ShapeDtypeStruct((B, S, D), qkv.dtype),
        grid_spec=pltpu.PrefetchScalarGridSpec(
            num_scalar_prefetch=0,
            grid=grid,
            in_specs=[
                pl.BlockSpec((None, None, tq, D), lambda b, qi, ki: (0, b, qi, 0)),
                pl.BlockSpec((None, None, tk, D), lambda b, qi, ki: (1, b, ki, 0)),
                pl.BlockSpec((None, None, tk, D), lambda b, qi, ki: (2, b, ki, 0)),
                pl.BlockSpec((None, tq, tk), lambda b, qi, ki: (b, qi, ki)),
            ],
            out_specs=pl.BlockSpec((None, tq, D), lambda b, qi, ki: (b, qi, 0)),
            scratch_shapes=[
                pltpu.VMEM((tq, num_heads), jnp.float32),   # running max m
                pltpu.VMEM((tq, num_heads), jnp.float32),   # running sum l
                pltpu.VMEM((tq, D), jnp.float32),           # output accumulator
            ],
        ),
        compiler_params=pltpu.CompilerParams(
            dimension_semantics=("parallel", "parallel", "arbitrary")),
    )(qkv, qkv, qkv, mask_bias)


# --------------------------- module-level wrappers ----------------------------

def self_attention_sublayer(params, xn, *, residual=None, mask=None, num_heads):
    """Multi-headed self-attention sublayer; optionally fuses a residual add
    into its final (output-projection) Pallas kernel."""
    B, S, D = xn.shape
    xn2d = xn.reshape(B * S, D)

    # fused QKV projection: one pass over xn, packed (3, B, S, D), no transposes
    qkv = pallas_qkv_proj(xn2d, params["w_qkv"], params["b_qkv"]).reshape(3, B, S, D)

    if mask is None:
        bias = jnp.zeros((B, S, S), jnp.float32)
    else:
        bias = jnp.where(jnp.broadcast_to(mask, (B, S, S)) == 0,
                         jnp.float32(-1e9), jnp.float32(0.0)).astype(jnp.float32)

    attn = pallas_mha_from_qkv(qkv, bias, num_heads=num_heads)         # (B, S, D)

    res2d = None if residual is None else residual.reshape(B * S, D)
    out2d = pallas_linear(attn.reshape(B * S, D), params["w_o"], params["b_o"],
                          residual2d=res2d)
    return out2d.reshape(B, S, D)


def sublayer_connection(ln_gamma, ln_beta, x, sublayer, dropout_rate=0.0):
    """SublayerConnection.forward: x + dropout(sublayer(LayerNorm(x))).

    Dropout is the identity (eval mode).  The residual add is fused into the
    sublayer's final Pallas kernel (passed via `residual=`).
    """
    # TODO(synk): training-mode dropout is not implemented (eval semantics).
    del dropout_rate
    xn = pallas_layer_norm(x, ln_gamma, ln_beta)
    return sublayer(xn, residual=x)


def transformer_prenorm_attention_block(params, x, mask, *, num_heads):
    sublayer = functools.partial(self_attention_sublayer, params,
                                 mask=mask, num_heads=num_heads)
    return sublayer_connection(params["ln_gamma"], params["ln_beta"], x, sublayer)


def init_params(key, d_model):
    """Deterministic params. Linear weights are stored PRE-TRANSPOSED (in, out)
    so no per-call w.T; Q/K/V weights are packed into one (3, D, D) tensor."""
    ks = jax.random.split(key, 10)

    def w_(k):
        return 0.05 * jax.random.normal(k, (d_model, d_model), jnp.float32)

    def b_(k):
        return 0.05 * jax.random.normal(k, (d_model,), jnp.float32)

    w_qkv = jnp.stack([w_(ks[0]), w_(ks[1]), w_(ks[2])])                # (3, D, D)
    b_qkv = jnp.stack([b_(ks[3]), b_(ks[4]), b_(ks[5])])[:, None, :]    # (3, 1, D)
    w_o, b_o = w_(ks[6]), b_(ks[7])
    ln_gamma = 1.0 + 0.05 * jax.random.normal(ks[8], (d_model,), jnp.float32)
    ln_beta = 0.05 * jax.random.normal(ks[9], (d_model,), jnp.float32)
    return dict(w_qkv=w_qkv, b_qkv=b_qkv, w_o=w_o, b_o=b_o,
                ln_gamma=ln_gamma, ln_beta=ln_beta)


# ----------------------------- pure-JAX reference -----------------------------

def _reference_forward(params, x, mask, num_heads):
    B, S, D = x.shape
    d_k = D // num_heads

    mean = jnp.mean(x, axis=-1, keepdims=True)
    var = jnp.mean((x - mean) ** 2, axis=-1, keepdims=True)
    xn = (x - mean) / jnp.sqrt(var + 1e-5) * params["ln_gamma"] + params["ln_beta"]

    def proj(i):
        y = xn @ params["w_qkv"][i] + params["b_qkv"][i, 0]
        return y.reshape(B, S, num_heads, d_k).transpose(0, 2, 1, 3)

    q, k, v = proj(0), proj(1), proj(2)
    scores = jnp.einsum("bhqd,bhkd->bhqk", q, k) / math.sqrt(d_k)
    if mask is not None:
        scores = jnp.where(mask[:, None, :, :] == 0, -1e9, scores)
    p = jax.nn.softmax(scores, axis=-1)
    attn = jnp.einsum("bhqk,bhkd->bhqd", p, v)
    attn = attn.transpose(0, 2, 1, 3).reshape(B, S, D)
    return x + attn @ params["w_o"] + params["b_o"]


# ------------------------------------ main -------------------------------------

if __name__ == "__main__":
    B, S, d_model, num_heads = 2, 8, 32, 4

    root = jax.random.PRNGKey(0)
    k_params, k_x, k_m = jax.random.split(root, 3)

    params = init_params(k_params, d_model)
    x = jax.random.normal(k_x, (B, S, d_model), jnp.float32)
    # 1 = attend, 0 = masked out (shared across heads, as in the PyTorch module)
    mask = (jax.random.uniform(k_m, (B, S, S)) > 0.2).astype(jnp.float32)

    fwd = jax.jit(functools.partial(transformer_prenorm_attention_block,
                                    num_heads=num_heads))
    out = jax.block_until_ready(fwd(params, x, mask))

    ref = _reference_forward(params, x, mask, num_heads)
    assert out.shape == (B, S, d_model)
    assert jnp.allclose(out, ref, atol=2e-2, rtol=2e-2), "mismatch vs reference"

    print("KERNEL_OK")
</pallas_src>

<mosaic_0001>
module attributes {stable_mosaic.version = 11 : i64} {
  func.func @_layer_norm_kernel(%arg0: i32, %arg1: memref<16x32xf32, #tpu.memory_space<vmem>>, %arg2: memref<1x32xf32, #tpu.memory_space<vmem>>, %arg3: memref<1x32xf32, #tpu.memory_space<vmem>>, %arg4: memref<16x32xf32, #tpu.memory_space<vmem>>) attributes {dimension_semantics = [#tpu.dimension_semantics<parallel>], iteration_bounds = array<i64: 1>, scalar_prefetch = 0 : i64, scratch_operands = 0 : i64, tpu.core_type = #tpu.core_type<tc>, window_params = [{transform_indices = @transform_0, window_bounds = array<i64: 16, 32>}, {pipeline_mode = #tpu.pipeline_mode<synchronous>, transform_indices = @transform_1, window_bounds = array<i64: 1, 32>}, {pipeline_mode = #tpu.pipeline_mode<synchronous>, transform_indices = @transform_2, window_bounds = array<i64: 1, 32>}, {transform_indices = @transform_3, window_bounds = array<i64: 16, 32>}]} {
    %c0 = arith.constant 0 : index
    %c0_0 = arith.constant 0 : index
    %0 = vector.load %arg1[%c0, %c0_0] : memref<16x32xf32, #tpu.memory_space<vmem>>, vector<16x32xf32>
    %cst = arith.constant dense<0.000000e+00> : vector<16xf32>
    %1 = vector.multi_reduction <add>, %0, %cst [1] : vector<16x32xf32> to vector<16xf32>
    %2 = vector.shape_cast %1 : vector<16xf32> to vector<16x1xf32>
    %cst_1 = arith.constant 3.200000e+01 : f32
    %3 = vector.broadcast %cst_1 : f32 to vector<16x1xf32>
    %4 = arith.divf %2, %3 : vector<16x1xf32>
    %5 = vector.broadcast %4 : vector<16x1xf32> to vector<16x32xf32>
    %6 = arith.subf %0, %5 : vector<16x32xf32>
    %7 = arith.mulf %6, %6 : vector<16x32xf32>
    %cst_2 = arith.constant dense<0.000000e+00> : vector<16xf32>
    %8 = vector.multi_reduction <add>, %7, %cst_2 [1] : vector<16x32xf32> to vector<16xf32>
    %9 = vector.shape_cast %8 : vector<16xf32> to vector<16x1xf32>
    %cst_3 = arith.constant 3.200000e+01 : f32
    %10 = vector.broadcast %cst_3 : f32 to vector<16x1xf32>
    %11 = arith.divf %9, %10 : vector<16x1xf32>
    %cst_4 = arith.constant 9.99999974E-6 : f32
    %12 = vector.broadcast %cst_4 : f32 to vector<16x1xf32>
    %13 = arith.addf %11, %12 : vector<16x1xf32>
    %14 = math.rsqrt %13 : vector<16x1xf32>
    %15 = vector.broadcast %14 : vector<16x1xf32> to vector<16x32xf32>
    %16 = arith.mulf %6, %15 : vector<16x32xf32>
    %c0_5 = arith.constant 0 : index
    %c0_6 = arith.constant 0 : index
    %17 = vector.load %arg2[%c0_5, %c0_6] : memref<1x32xf32, #tpu.memory_space<vmem>>, vector<1x32xf32>
    %18 = vector.broadcast %17 : vector<1x32xf32> to vector<16x32xf32>
    %19 = arith.mulf %16, %18 : vector<16x32xf32>
    %c0_7 = arith.constant 0 : index
    %c0_8 = arith.constant 0 : index
    %20 = vector.load %arg3[%c0_7, %c0_8] : memref<1x32xf32, #tpu.memory_space<vmem>>, vector<1x32xf32>
    %21 = vector.broadcast %20 : vector<1x32xf32> to vector<16x32xf32>
    %22 = arith.addf %19, %21 : vector<16x32xf32>
    %c0_9 = arith.constant 0 : index
    %c0_10 = arith.constant 0 : index
    %23 = vector.load %arg4[%c0_9, %c0_10] : memref<16x32xf32, #tpu.memory_space<vmem>>, vector<16x32xf32>
    tpu.vector_store %arg4[%c0_9, %c0_10], %22 {strides = array<i32>} : memref<16x32xf32, #tpu.memory_space<vmem>>, vector<16x32xf32>,
    return
  }
  func.func @transform_0(%arg0: i32) -> (i32, i32) {
    %c0_i32 = arith.constant 0 : i32
    %c0_i32_0 = arith.constant 0 : i32
    return %arg0, %c0_i32 : i32, i32
  }
  func.func @transform_1(%arg0: i32) -> (i32, i32) {
    %c0_i32 = arith.constant 0 : i32
    %c0_i32_0 = arith.constant 0 : i32
    %c0_i32_1 = arith.constant 0 : i32
    return %c0_i32, %c0_i32_0 : i32, i32
  }
  func.func @transform_2(%arg0: i32) -> (i32, i32) {
    %c0_i32 = arith.constant 0 : i32
    %c0_i32_0 = arith.constant 0 : i32
    %c0_i32_1 = arith.constant 0 : i32
    return %c0_i32, %c0_i32_0 : i32, i32
  }
  func.func @transform_3(%arg0: i32) -> (i32, i32) {
    %c0_i32 = arith.constant 0 : i32
    %c0_i32_0 = arith.constant 0 : i32
    return %arg0, %c0_i32 : i32, i32
  }
}

module attributes {stable_mosaic.version = 11 : i64} {
  func.func @_linear_kernel(%arg0: i32, %arg1: i32, %arg2: i32, %arg3: memref<16x32xf32, #tpu.memory_space<vmem>>, %arg4: memref<1x32x32xf32, #tpu.memory_space<vmem>>, %arg5: memref<1x1x32xf32, #tpu.memory_space<vmem>>, %arg6: memref<1x16x32xf32, #tpu.memory_space<vmem>>, %arg7: memref<16x32xf32, #tpu.memory_space<vmem>>) attributes {dimension_semantics = [#tpu.dimension_semantics<parallel>, #tpu.dimension_semantics<parallel>, #tpu.dimension_semantics<arbitrary>], iteration_bounds = array<i64: 1, 3, 1>, scalar_prefetch = 0 : i64, scratch_operands = 1 : i64, tpu.core_type = #tpu.core_type<tc>, window_params = [{transform_indices = @transform_0, window_bounds = array<i64: 16, 32>}, {transform_indices = @transform_1, window_bounds = array<i64: 1, 32, 32>}, {transform_indices = @transform_2, window_bounds = array<i64: 1, 1, 32>}, {transform_indices = @transform_3, window_bounds = array<i64: 1, 16, 32>}]} {
    %c0_i32 = arith.constant 0 : i32
    %0 = arith.cmpi eq, %arg2, %c0_i32 : i32
    %1 = arith.extui %0 : i1 to i32
    %c0_i32_0 = arith.constant 0 : i32
    %2 = arith.cmpi ne, %1, %c0_i32_0 : i32
    scf.if %2 {
      %cst_11 = arith.constant 0.000000e+00 : f32
      %13 = vector.broadcast %cst_11 : f32 to vector<16x32xf32>
      %c0_12 = arith.constant 0 : index
      %c0_13 = arith.constant 0 : index
      %14 = vector.load %arg7[%c0_12, %c0_13] : memref<16x32xf32, #tpu.memory_space<vmem>>, vector<16x32xf32>
      tpu.vector_store %arg7[%c0_12, %c0_13], %13 {strides = array<i32>} : memref<16x32xf32, #tpu.memory_space<vmem>>, vector<16x32xf32>,
    } else {
    }
    %c0 = arith.constant 0 : index
    %c0_1 = arith.constant 0 : index
    %3 = vector.load %arg7[%c0, %c0_1] : memref<16x32xf32, #tpu.memory_space<vmem>>, vector<16x32xf32>
    %c0_2 = arith.constant 0 : index
    %c0_3 = arith.constant 0 : index
    %4 = vector.load %arg3[%c0_2, %c0_3] : memref<16x32xf32, #tpu.memory_space<vmem>>, vector<16x32xf32>
    %c0_4 = arith.constant 0 : index
    %c0_5 = arith.constant 0 : index
    %c0_6 = arith.constant 0 : index
    %5 = vector.load %arg4[%c0_4, %c0_5, %c0_6] : memref<1x32x32xf32, #tpu.memory_space<vmem>>, vector<1x32x32xf32>
    %6 = vector.shape_cast %5 : vector<1x32x32xf32> to vector<32x32xf32>
    %cst = arith.constant dense<0.000000e+00> : vector<16x32xf32>
    %7 = tpu.matmul %4, %6, %cst {dimension_numbers = #tpu.dot_dimension_numbers<[1], [0], [0], [1], [0, 0, 1, 1], [], []>} : vector<16x32xf32>, vector<32x32xf32>, vector<16x32xf32> -> vector<16x32xf32>
    %8 = arith.addf %3, %7 : vector<16x32xf32>
    %c0_7 = arith.constant 0 : index
    %c0_8 = arith.constant 0 : index
    %9 = vector.load %arg7[%c0_7, %c0_8] : memref<16x32xf32, #tpu.memory_space<vmem>>, vector<16x32xf32>
    tpu.vector_store %arg7[%c0_7, %c0_8], %8 {strides = array<i32>} : memref<16x32xf32, #tpu.memory_space<vmem>>, vector<16x32xf32>,
    %c0_i32_9 = arith.constant 0 : i32
    %10 = arith.cmpi eq, %arg2, %c0_i32_9 : i32
    %11 = arith.extui %10 : i1 to i32
    %c0_i32_10 = arith.constant 0 : i32
    %12 = arith.cmpi ne, %11, %c0_i32_10 : i32
    scf.if %12 {
      %c0_11 = arith.constant 0 : index
      %c0_12 = arith.constant 0 : index
      %13 = vector.load %arg7[%c0_11, %c0_12] : memref<16x32xf32, #tpu.memory_space<vmem>>, vector<16x32xf32>
      %c0_13 = arith.constant 0 : index
      %c0_14 = arith.constant 0 : index
      %c0_15 = arith.constant 0 : index
      %14 = vector.load %arg5[%c0_13, %c0_14, %c0_15] : memref<1x1x32xf32, #tpu.memory_space<vmem>>, vector<1x1x32xf32>
      %15 = vector.shape_cast %14 : vector<1x1x32xf32> to vector<1x32xf32>
      %16 = vector.broadcast %15 : vector<1x32xf32> to vector<16x32xf32>
      %17 = arith.addf %13, %16 : vector<16x32xf32>
      %c0_16 = arith.constant 0 : index
      %c0_17 = arith.constant 0 : index
      %c0_18 = arith.constant 0 : index
      %18 = vector.load %arg6[%c0_16, %c0_17, %c0_18] : memref<1x16x32xf32, #tpu.memory_space<vmem>>, vector<1x16x32xf32>
      %19 = vector.shape_cast %18 : vector<1x16x32xf32> to vector<16x32xf32>
      %20 = vector.shape_cast %17 : vector<16x32xf32> to vector<1x16x32xf32>
      tpu.vector_store %arg6[%c0_16, %c0_17, %c0_18], %20 {strides = array<i32>} : memref<1x16x32xf32, #tpu.memory_space<vmem>>, vector<1x16x32xf32>,
    } else {
    }
    return
  }
  func.func @transform_0(%arg0: i32, %arg1: i32, %arg2: i32) -> (i32, i32) {
    %c0_i32 = arith.constant 0 : i32
    return %arg0, %arg2 : i32, i32
  }
  func.func @transform_1(%arg0: i32, %arg1: i32, %arg2: i32) -> (i32, i32, i32) {
    %c0_i32 = arith.constant 0 : i32
    %c0_i32_0 = arith.constant 0 : i32
    return %arg1, %arg2, %c0_i32 : i32, i32, i32
  }
  func.func @transform_2(%arg0: i32, %arg1: i32, %arg2: i32) -> (i32, i32, i32) {
    %c0_i32 = arith.constant 0 : i32
    %c0_i32_0 = arith.constant 0 : i32
    %c0_i32_1 = arith.constant 0 : i32
    return %arg1, %c0_i32, %c0_i32_0 : i32, i32, i32
  }
  func.func @transform_3(%arg0: i32, %arg1: i32, %arg2: i32) -> (i32, i32, i32) {
    %c0_i32 = arith.constant 0 : i32
    %c0_i32_0 = arith.constant 0 : i32
    return %arg1, %arg0, %c0_i32 : i32, i32, i32
  }
}

module attributes {stable_mosaic.version = 11 : i64} {
  func.func @_mha_flash_kernel(%arg0: i32, %arg1: i32, %arg2: i32, %arg3: memref<1x1x8x32xf32, #tpu.memory_space<vmem>>, %arg4: memref<1x1x8x32xf32, #tpu.memory_space<vmem>>, %arg5: memref<1x1x8x32xf32, #tpu.memory_space<vmem>>, %arg6: memref<1x8x8xf32, #tpu.memory_space<vmem>>, %arg7: memref<1x8x32xf32, #tpu.memory_space<vmem>>, %arg8: memref<8x4xf32, #tpu.memory_space<vmem>>, %arg9: memref<8x4xf32, #tpu.memory_space<vmem>>, %arg10: memref<8x32xf32, #tpu.memory_space<vmem>>) attributes {dimension_semantics = [#tpu.dimension_semantics<parallel>, #tpu.dimension_semantics<parallel>, #tpu.dimension_semantics<arbitrary>], iteration_bounds = array<i64: 2, 1, 1>, scalar_prefetch = 0 : i64, scratch_operands = 3 : i64, tpu.core_type = #tpu.core_type<tc>, window_params = [{transform_indices = @transform_0, window_bounds = array<i64: 1, 1, 8, 32>}, {transform_indices = @transform_1, window_bounds = array<i64: 1, 1, 8, 32>}, {transform_indices = @transform_2, window_bounds = array<i64: 1, 1, 8, 32>}, {transform_indices = @transform_3, window_bounds = array<i64: 1, 8, 8>}, {transform_indices = @transform_4, window_bounds = array<i64: 1, 8, 32>}]} {
    %c0_i32 = arith.constant 0 : i32
    %0 = arith.cmpi eq, %arg2, %c0_i32 : i32
    %1 = arith.extui %0 : i1 to i32
    %c0_i32_0 = arith.constant 0 : i32
    %2 = arith.cmpi ne, %1, %c0_i32_0 : i32
    scf.if %2 {
      %cst_75 = arith.constant 0xFF800000 : f32
      %124 = vector.broadcast %cst_75 : f32 to vector<8x4xf32>
      %c0_76 = arith.constant 0 : index
      %c0_77 = arith.constant 0 : index
      %125 = vector.load %arg8[%c0_76, %c0_77] : memref<8x4xf32, #tpu.memory_space<vmem>>, vector<8x4xf32>
      tpu.vector_store %arg8[%c0_76, %c0_77], %124 {strides = array<i32>} : memref<8x4xf32, #tpu.memory_space<vmem>>, vector<8x4xf32>,
      %cst_78 = arith.constant 0.000000e+00 : f32
      %126 = vector.broadcast %cst_78 : f32 to vector<8x4xf32>
      %c0_79 = arith.constant 0 : index
      %c0_80 = arith.constant 0 : index
      %127 = vector.load %arg9[%c0_79, %c0_80] : memref<8x4xf32, #tpu.memory_space<vmem>>, vector<8x4xf32>
      tpu.vector_store %arg9[%c0_79, %c0_80], %126 {strides = array<i32>} : memref<8x4xf32, #tpu.memory_space<vmem>>, vector<8x4xf32>,
      %cst_81 = arith.constant 0.000000e+00 : f32
      %128 = vector.broadcast %cst_81 : f32 to vector<8x32xf32>
      %c0_82 = arith.constant 0 : index
      %c0_83 = arith.constant 0 : index
      %129 = vector.load %arg10[%c0_82, %c0_83] : memref<8x32xf32, #tpu.memory_space<vmem>>, vector<8x32xf32>
      tpu.vector_store %arg10[%c0_82, %c0_83], %128 {strides = array<i32>} : memref<8x32xf32, #tpu.memory_space<vmem>>, vector<8x32xf32>,
    } else {
    }
    %c0 = arith.constant 0 : index
    %c0_1 = arith.constant 0 : index
    %c0_2 = arith.constant 0 : index
    %3 = vector.load %arg6[%c0, %c0_1, %c0_2] : memref<1x8x8xf32, #tpu.memory_space<vmem>>, vector<1x8x8xf32>
    %4 = vector.shape_cast %3 : vector<1x8x8xf32> to vector<8x8xf32>
    %c0_3 = arith.constant 0 : index
    %c0_4 = arith.constant 0 : index
    %c0_5 = arith.constant 0 : index
    %c0_6 = arith.constant 0 : index
    %5 = vector.load %arg3[%c0_3, %c0_4, %c0_5, %c0_6] : memref<1x1x8x32xf32, #tpu.memory_space<vmem>>, vector<1x1x8x32xf32>
    %6 = vector.shape_cast %5 : vector<1x1x8x32xf32> to vector<8x32xf32>
    %cst = arith.constant 0.353553385 : f32
    %7 = vector.broadcast %cst : f32 to vector<8x32xf32>
    %8 = arith.mulf %6, %7 : vector<8x32xf32>
    %c0_7 = arith.constant 0 : index
    %c0_8 = arith.constant 0 : index
    %c0_9 = arith.constant 0 : index
    %c0_10 = arith.constant 0 : index
    %9 = vector.load %arg4[%c0_7, %c0_8, %c0_9, %c0_10] : memref<1x1x8x32xf32, #tpu.memory_space<vmem>>, vector<1x1x8x32xf32>
    %10 = vector.shape_cast %9 : vector<1x1x8x32xf32> to vector<8x32xf32>
    %c0_11 = arith.constant 0 : index
    %c0_12 = arith.constant 0 : index
    %c0_13 = arith.constant 0 : index
    %c0_14 = arith.constant 0 : index
    %11 = vector.load %arg5[%c0_11, %c0_12, %c0_13, %c0_14] : memref<1x1x8x32xf32, #tpu.memory_space<vmem>>, vector<1x1x8x32xf32>
    %12 = vector.shape_cast %11 : vector<1x1x8x32xf32> to vector<8x32xf32>
    %13 = vector.extract_strided_slice %8 {offsets = [0, 0], sizes = [8, 8], strides = [1, 1]} : vector<8x32xf32> to vector<8x8xf32>
    %14 = vector.extract_strided_slice %10 {offsets = [0, 0], sizes = [8, 8], strides = [1, 1]} : vector<8x32xf32> to vector<8x8xf32>
    %15 = vector.extract_strided_slice %12 {offsets = [0, 0], sizes = [8, 8], strides = [1, 1]} : vector<8x32xf32> to vector<8x8xf32>
    %cst_15 = arith.constant dense<0.000000e+00> : vector<8x8xf32>
    %16 = tpu.matmul %13, %14, %cst_15 {dimension_numbers = #tpu.dot_dimension_numbers<[1], [1], [0], [0], [0, 0, 1, 0], [], []>} : vector<8x8xf32>, vector<8x8xf32>, vector<8x8xf32> -> vector<8x8xf32>
    %17 = arith.addf %16, %4 : vector<8x8xf32>
    %c0_16 = arith.constant 0 : index
    %c0_17 = arith.constant 0 : index
    %18 = vector.load %arg8[%c0_16, %c0_17] : memref<8x4xf32, #tpu.memory_space<vmem>>, vector<8x1xf32>
    %c0_18 = arith.constant 0 : index
    %c0_19 = arith.constant 0 : index
    %19 = vector.load %arg9[%c0_18, %c0_19] : memref<8x4xf32, #tpu.memory_space<vmem>>, vector<8x1xf32>
    %cst_20 = arith.constant dense<0xFF800000> : vector<8xf32>
    %20 = vector.multi_reduction <maximumf>, %17, %cst_20 [1] : vector<8x8xf32> to vector<8xf32>
    %21 = vector.shape_cast %20 : vector<8xf32> to vector<8x1xf32>
    %22 = arith.maximumf %18, %21 : vector<8x1xf32>
    %23 = arith.subf %18, %22 : vector<8x1xf32>
    %24 = math.exp %23 : vector<8x1xf32>
    %25 = vector.broadcast %22 : vector<8x1xf32> to vector<8x8xf32>
    %26 = arith.subf %17, %25 : vector<8x8xf32>
    %27 = math.exp %26 : vector<8x8xf32>
    %28 = arith.mulf %24, %19 : vector<8x1xf32>
    %cst_21 = arith.constant dense<0.000000e+00> : vector<8xf32>
    %29 = vector.multi_reduction <add>, %27, %cst_21 [1] : vector<8x8xf32> to vector<8xf32>
    %30 = vector.shape_cast %29 : vector<8xf32> to vector<8x1xf32>
    %31 = arith.addf %28, %30 : vector<8x1xf32>
    %c0_22 = arith.constant 0 : index
    %c0_23 = arith.constant 0 : index
    %32 = vector.load %arg9[%c0_22, %c0_23] : memref<8x4xf32, #tpu.memory_space<vmem>>, vector<8x1xf32>
    tpu.vector_store %arg9[%c0_22, %c0_23], %31 {strides = array<i32>} : memref<8x4xf32, #tpu.memory_space<vmem>>, vector<8x1xf32>,
    %c0_24 = arith.constant 0 : index
    %c0_25 = arith.constant 0 : index
    %33 = vector.load %arg8[%c0_24, %c0_25] : memref<8x4xf32, #tpu.memory_space<vmem>>, vector<8x1xf32>
    tpu.vector_store %arg8[%c0_24, %c0_25], %22 {strides = array<i32>} : memref<8x4xf32, #tpu.memory_space<vmem>>, vector<8x1xf32>,
    %cst_26 = arith.constant dense<0.000000e+00> : vector<8x8xf32>
    %34 = tpu.matmul %27, %15, %cst_26 {dimension_numbers = #tpu.dot_dimension_numbers<[1], [0], [0], [1], [0, 0, 1, 1], [], []>} : vector<8x8xf32>, vector<8x8xf32>, vector<8x8xf32> -> vector<8x8xf32>
    %c0_27 = arith.constant 0 : index
    %c0_28 = arith.constant 0 : index
    %35 = vector.load %arg10[%c0_27, %c0_28] : memref<8x32xf32, #tpu.memory_space<vmem>>, vector<8x8xf32>
    %36 = vector.broadcast %24 : vector<8x1xf32> to vector<8x8xf32>
    %37 = arith.mulf %36, %35 : vector<8x8xf32>
    %38 = arith.addf %37, %34 : vector<8x8xf32>
    %c0_29 = arith.constant 0 : index
    %c0_30 = arith.constant 0 : index
    %39 = vector.load %arg10[%c0_29, %c0_30] : memref<8x32xf32, #tpu.memory_space<vmem>>, vector<8x8xf32>
    tpu.vector_store %arg10[%c0_29, %c0_30], %38 {strides = array<i32>} : memref<8x32xf32, #tpu.memory_space<vmem>>, vector<8x8xf32>,
    %40 = vector.extract_strided_slice %8 {offsets = [0, 8], sizes = [8, 8], strides = [1, 1]} : vector<8x32xf32> to vector<8x8xf32>
    %41 = vector.extract_strided_slice %10 {offsets = [0, 8], sizes = [8, 8], strides = [1, 1]} : vector<8x32xf32> to vector<8x8xf32>
    %42 = vector.extract_strided_slice %12 {offsets = [0, 8], sizes = [8, 8], strides = [1, 1]} : vector<8x32xf32> to vector<8x8xf32>
    %cst_31 = arith.constant dense<0.000000e+00> : vector<8x8xf32>
    %43 = tpu.matmul %40, %41, %cst_31 {dimension_numbers = #tpu.dot_dimension_numbers<[1], [1], [0], [0], [0, 0, 1, 0], [], []>} : vector<8x8xf32>, vector<8x8xf32>, vector<8x8xf32> -> vector<8x8xf32>
    %44 = arith.addf %43, %4 : vector<8x8xf32>
    %c0_32 = arith.constant 0 : index
    %c1 = arith.constant 1 : index
    %45 = vector.load %arg8[%c0_32, %c1] : memref<8x4xf32, #tpu.memory_space<vmem>>, vector<8x1xf32>
    %c0_33 = arith.constant 0 : index
    %c1_34 = arith.constant 1 : index
    %46 = vector.load %arg9[%c0_33, %c1_34] : memref<8x4xf32, #tpu.memory_space<vmem>>, vector<8x1xf32>
    %cst_35 = arith.constant dense<0xFF800000> : vector<8xf32>
    %47 = vector.multi_reduction <maximumf>, %44, %cst_35 [1] : vector<8x8xf32> to vector<8xf32>
    %48 = vector.shape_cast %47 : vector<8xf32> to vector<8x1xf32>
    %49 = arith.maximumf %45, %48 : vector<8x1xf32>
    %50 = arith.subf %45, %49 : vector<8x1xf32>
    %51 = math.exp %50 : vector<8x1xf32>
    %52 = vector.broadcast %49 : vector<8x1xf32> to vector<8x8xf32>
    %53 = arith.subf %44, %52 : vector<8x8xf32>
    %54 = math.exp %53 : vector<8x8xf32>
    %55 = arith.mulf %51, %46 : vector<8x1xf32>
    %cst_36 = arith.constant dense<0.000000e+00> : vector<8xf32>
    %56 = vector.multi_reduction <add>, %54, %cst_36 [1] : vector<8x8xf32> to vector<8xf32>
    %57 = vector.shape_cast %56 : vector<8xf32> to vector<8x1xf32>
    %58 = arith.addf %55, %57 : vector<8x1xf32>
    %c0_37 = arith.constant 0 : index
    %c1_38 = arith.constant 1 : index
    %59 = vector.load %arg9[%c0_37, %c1_38] : memref<8x4xf32, #tpu.memory_space<vmem>>, vector<8x1xf32>
    tpu.vector_store %arg9[%c0_37, %c1_38], %58 {strides = array<i32>} : memref<8x4xf32, #tpu.memory_space<vmem>>, vector<8x1xf32>,
    %c0_39 = arith.constant 0 : index
    %c1_40 = arith.constant 1 : index
    %60 = vector.load %arg8[%c0_39, %c1_40] : memref<8x4xf32, #tpu.memory_space<vmem>>, vector<8x1xf32>
    tpu.vector_store %arg8[%c0_39, %c1_40], %49 {strides = array<i32>} : memref<8x4xf32, #tpu.memory_space<vmem>>, vector<8x1xf32>,
    %cst_41 = arith.constant dense<0.000000e+00> : vector<8x8xf32>
    %61 = tpu.matmul %54, %42, %cst_41 {dimension_numbers = #tpu.dot_dimension_numbers<[1], [0], [0], [1], [0, 0, 1, 1], [], []>} : vector<8x8xf32>, vector<8x8xf32>, vector<8x8xf32> -> vector<8x8xf32>
    %c0_42 = arith.constant 0 : index
    %c8 = arith.constant 8 : index
    %62 = vector.load %arg10[%c0_42, %c8] : memref<8x32xf32, #tpu.memory_space<vmem>>, vector<8x8xf32>
    %63 = vector.broadcast %51 : vector<8x1xf32> to vector<8x8xf32>
    %64 = arith.mulf %63, %62 : vector<8x8xf32>
    %65 = arith.addf %64, %61 : vector<8x8xf32>
    %c0_43 = arith.constant 0 : index
    %c8_44 = arith.constant 8 : index
    %66 = vector.load %arg10[%c0_43, %c8_44] : memref<8x32xf32, #tpu.memory_space<vmem>>, vector<8x8xf32>
    tpu.vector_store %arg10[%c0_43, %c8_44], %65 {strides = array<i32>} : memref<8x32xf32, #tpu.memory_space<vmem>>, vector<8x8xf32>,
    %67 = vector.extract_strided_slice %8 {offsets = [0, 16], sizes = [8, 8], strides = [1, 1]} : vector<8x32xf32> to vector<8x8xf32>
    %68 = vector.extract_strided_slice %10 {offsets = [0, 16], sizes = [8, 8], strides = [1, 1]} : vector<8x32xf32> to vector<8x8xf32>
    %69 = vector.extract_strided_slice %12 {offsets = [0, 16], sizes = [8, 8], strides = [1, 1]} : vector<8x32xf32> to vector<8x8xf32>
    %cst_45 = arith.constant dense<0.000000e+00> : vector<8x8xf32>
    %70 = tpu.matmul %67, %68, %cst_45 {dimension_numbers = #tpu.dot_dimension_numbers<[1], [1], [0], [0], [0, 0, 1, 0], [], []>} : vector<8x8xf32>, vector<8x8xf32>, vector<8x8xf32> -> vector<8x8xf32>
    %71 = arith.addf %70, %4 : vector<8x8xf32>
    %c0_46 = arith.constant 0 : index
    %c2 = arith.constant 2 : index
    %72 = vector.load %arg8[%c0_46, %c2] : memref<8x4xf32, #tpu.memory_space<vmem>>, vector<8x1xf32>
    %c0_47 = arith.constant 0 : index
    %c2_48 = arith.constant 2 : index
    %73 = vector.load %arg9[%c0_47, %c2_48] : memref<8x4xf32, #tpu.memory_space<vmem>>, vector<8x1xf32>
    %cst_49 = arith.constant dense<0xFF800000> : vector<8xf32>
    %74 = vector.multi_reduction <maximumf>, %71, %cst_49 [1] : vector<8x8xf32> to vector<8xf32>
    %75 = vector.shape_cast %74 : vector<8xf32> to vector<8x1xf32>
    %76 = arith.maximumf %72, %75 : vector<8x1xf32>
    %77 = arith.subf %72, %76 : vector<8x1xf32>
    %78 = math.exp %77 : vector<8x1xf32>
    %79 = vector.broadcast %76 : vector<8x1xf32> to vector<8x8xf32>
    %80 = arith.subf %71, %79 : vector<8x8xf32>
    %81 = math.exp %80 : vector<8x8xf32>
    %82 = arith.mulf %78, %73 : vector<8x1xf32>
    %cst_50 = arith.constant dense<0.000000e+00> : vector<8xf32>
    %83 = vector.multi_reduction <add>, %81, %cst_50 [1] : vector<8x8xf32> to vector<8xf32>
    %84 = vector.shape_cast %83 : vector<8xf32> to vector<8x1xf32>
    %85 = arith.addf %82, %84 : vector<8x1xf32>
    %c0_51 = arith.constant 0 : index
    %c2_52 = arith.constant 2 : index
    %86 = vector.load %arg9[%c0_51, %c2_52] : memref<8x4xf32, #tpu.memory_space<vmem>>, vector<8x1xf32>
    tpu.vector_store %arg9[%c0_51, %c2_52], %85 {strides = array<i32>} : memref<8x4xf32, #tpu.memory_space<vmem>>, vector<8x1xf32>,
    %c0_53 = arith.constant 0 : index
    %c2_54 = arith.constant 2 : index
    %87 = vector.load %arg8[%c0_53, %c2_54] : memref<8x4xf32, #tpu.memory_space<vmem>>, vector<8x1xf32>
    tpu.vector_store %arg8[%c0_53, %c2_54], %76 {strides = array<i32>} : memref<8x4xf32, #tpu.memory_space<vmem>>, vector<8x1xf32>,
    %cst_55 = arith.constant dense<0.000000e+00> : vector<8x8xf32>
    %88 = tpu.matmul %81, %69, %cst_55 {dimension_numbers = #tpu.dot_dimension_numbers<[1], [0], [0], [1], [0, 0, 1, 1], [], []>} : vector<8x8xf32>, vector<8x8xf32>, vector<8x8xf32> -> vector<8x8xf32>
    %c0_56 = arith.constant 0 : index
    %c16 = arith.constant 16 : index
    %89 = vector.load %arg10[%c0_56, %c16] : memref<8x32xf32, #tpu.memory_space<vmem>>, vector<8x8xf32>
    %90 = vector.broadcast %78 : vector<8x1xf32> to vector<8x8xf32>
    %91 = arith.mulf %90, %89 : vector<8x8xf32>
    %92 = arith.addf %91, %88 : vector<8x8xf32>
    %c0_57 = arith.constant 0 : index
    %c16_58 = arith.constant 16 : index
    %93 = vector.load %arg10[%c0_57, %c16_58] : memref<8x32xf32, #tpu.memory_space<vmem>>, vector<8x8xf32>
    tpu.vector_store %arg10[%c0_57, %c16_58], %92 {strides = array<i32>} : memref<8x32xf32, #tpu.memory_space<vmem>>, vector<8x8xf32>,
    %94 = vector.extract_strided_slice %8 {offsets = [0, 24], sizes = [8, 8], strides = [1, 1]} : vector<8x32xf32> to vector<8x8xf32>
    %95 = vector.extract_strided_slice %10 {offsets = [0, 24], sizes = [8, 8], strides = [1, 1]} : vector<8x32xf32> to vector<8x8xf32>
    %96 = vector.extract_strided_slice %12 {offsets = [0, 24], sizes = [8, 8], strides = [1, 1]} : vector<8x32xf32> to vector<8x8xf32>
    %cst_59 = arith.constant dense<0.000000e+00> : vector<8x8xf32>
    %97 = tpu.matmul %94, %95, %cst_59 {dimension_numbers = #tpu.dot_dimension_numbers<[1], [1], [0], [0], [0, 0, 1, 0], [], []>} : vector<8x8xf32>, vector<8x8xf32>, vector<8x8xf32> -> vector<8x8xf32>
    %98 = arith.addf %97, %4 : vector<8x8xf32>
    %c0_60 = arith.constant 0 : index
    %c3 = arith.constant 3 : index
    %99 = vector.load %arg8[%c0_60, %c3] : memref<8x4xf32, #tpu.memory_space<vmem>>, vector<8x1xf32>
    %c0_61 = arith.constant 0 : index
    %c3_62 = arith.constant 3 : index
    %100 = vector.load %arg9[%c0_61, %c3_62] : memref<8x4xf32, #tpu.memory_space<vmem>>, vector<8x1xf32>
    %cst_63 = arith.constant dense<0xFF800000> : vector<8xf32>
    %101 = vector.multi_reduction <maximumf>, %98, %cst_63 [1] : vector<8x8xf32> to vector<8xf32>
    %102 = vector.shape_cast %101 : vector<8xf32> to vector<8x1xf32>
    %103 = arith.maximumf %99, %102 : vector<8x1xf32>
    %104 = arith.subf %99, %103 : vector<8x1xf32>
    %105 = math.exp %104 : vector<8x1xf32>
    %106 = vector.broadcast %103 : vector<8x1xf32> to vector<8x8xf32>
    %107 = arith.subf %98, %106 : vector<8x8xf32>
    %108 = math.exp %107 : vector<8x8xf32>
    %109 = arith.mulf %105, %100 : vector<8x1xf32>
    %cst_64 = arith.constant dense<0.000000e+00> : vector<8xf32>
    %110 = vector.multi_reduction <add>, %108, %cst_64 [1] : vector<8x8xf32> to vector<8xf32>
    %111 = vector.shape_cast %110 : vector<8xf32> to vector<8x1xf32>
    %112 = arith.addf %109, %111 : vector<8x1xf32>
    %c0_65 = arith.constant 0 : index
    %c3_66 = arith.constant 3 : index
    %113 = vector.load %arg9[%c0_65, %c3_66] : memref<8x4xf32, #tpu.memory_space<vmem>>, vector<8x1xf32>
    tpu.vector_store %arg9[%c0_65, %c3_66], %112 {strides = array<i32>} : memref<8x4xf32, #tpu.memory_space<vmem>>, vector<8x1xf32>,
    %c0_67 = arith.constant 0 : index
    %c3_68 = arith.constant 3 : index
    %114 = vector.load %arg8[%c0_67, %c3_68] : memref<8x4xf32, #tpu.memory_space<vmem>>, vector<8x1xf32>
    tpu.vector_store %arg8[%c0_67, %c3_68], %103 {strides = array<i32>} : memref<8x4xf32, #tpu.memory_space<vmem>>, vector<8x1xf32>,
    %cst_69 = arith.constant dense<0.000000e+00> : vector<8x8xf32>
    %115 = tpu.matmul %108, %96, %cst_69 {dimension_numbers = #tpu.dot_dimension_numbers<[1], [0], [0], [1], [0, 0, 1, 1], [], []>} : vector<8x8xf32>, vector<8x8xf32>, vector<8x8xf32> -> vector<8x8xf32>
    %c0_70 = arith.constant 0 : index
    %c24 = arith.constant 24 : index
    %116 = vector.load %arg10[%c0_70, %c24] : memref<8x32xf32, #tpu.memory_space<vmem>>, vector<8x8xf32>
    %117 = vector.broadcast %105 : vector<8x1xf32> to vector<8x8xf32>
    %118 = arith.mulf %117, %116 : vector<8x8xf32>
    %119 = arith.addf %118, %115 : vector<8x8xf32>
    %c0_71 = arith.constant 0 : index
    %c24_72 = arith.constant 24 : index
    %120 = vector.load %arg10[%c0_71, %c24_72] : memref<8x32xf32, #tpu.memory_space<vmem>>, vector<8x8xf32>
    tpu.vector_store %arg10[%c0_71, %c24_72], %119 {strides = array<i32>} : memref<8x32xf32, #tpu.memory_space<vmem>>, vector<8x8xf32>,
    %c0_i32_73 = arith.constant 0 : i32
    %121 = arith.cmpi eq, %arg2, %c0_i32_73 : i32
    %122 = arith.extui %121 : i1 to i32
    %c0_i32_74 = arith.constant 0 : i32
    %123 = arith.cmpi ne, %122, %c0_i32_74 : i32
    scf.if %123 {
      %c0_75 = arith.constant 0 : index
      %c0_76 = arith.constant 0 : index
      %124 = vector.load %arg9[%c0_75, %c0_76] : memref<8x4xf32, #tpu.memory_space<vmem>>, vector<8x4xf32>
      %125 = tpu.reciprocal %124 {approx = true} : vector<8x4xf32> -> vector<8x4xf32>
      %c0_77 = arith.constant 0 : index
      %c0_78 = arith.constant 0 : index
      %126 = vector.load %arg10[%c0_77, %c0_78] : memref<8x32xf32, #tpu.memory_space<vmem>>, vector<8x8xf32>
      %127 = vector.extract_strided_slice %125 {offsets = [0, 0], sizes = [8, 1], strides = [1, 1]} : vector<8x4xf32> to vector<8x1xf32>
      %128 = vector.broadcast %127 : vector<8x1xf32> to vector<8x8xf32>
      %129 = arith.mulf %126, %128 : vector<8x8xf32>
      %c0_79 = arith.constant 0 : index
      %c0_80 = arith.constant 0 : index
      %c0_81 = arith.constant 0 : index
      %130 = vector.load %arg7[%c0_79, %c0_80, %c0_81] : memref<1x8x32xf32, #tpu.memory_space<vmem>>, vector<1x8x8xf32>
      %131 = vector.shape_cast %130 : vector<1x8x8xf32> to vector<8x8xf32>
      %132 = vector.shape_cast %129 : vector<8x8xf32> to vector<1x8x8xf32>
      tpu.vector_store %arg7[%c0_79, %c0_80, %c0_81], %132 {strides = array<i32>} : memref<1x8x32xf32, #tpu.memory_space<vmem>>, vector<1x8x8xf32>,
      %c0_82 = arith.constant 0 : index
      %c8_83 = arith.constant 8 : index
      %133 = vector.load %arg10[%c0_82, %c8_83] : memref<8x32xf32, #tpu.memory_space<vmem>>, vector<8x8xf32>
      %134 = vector.extract_strided_slice %125 {offsets = [0, 1], sizes = [8, 1], strides = [1, 1]} : vector<8x4xf32> to vector<8x1xf32>
      %135 = vector.broadcast %134 : vector<8x1xf32> to vector<8x8xf32>
      %136 = arith.mulf %133, %135 : vector<8x8xf32>
      %c0_84 = arith.constant 0 : index
      %c0_85 = arith.constant 0 : index
      %c8_86 = arith.constant 8 : index
      %137 = vector.load %arg7[%c0_84, %c0_85, %c8_86] : memref<1x8x32xf32, #tpu.memory_space<vmem>>, vector<1x8x8xf32>
      %138 = vector.shape_cast %137 : vector<1x8x8xf32> to vector<8x8xf32>
      %139 = vector.shape_cast %136 : vector<8x8xf32> to vector<1x8x8xf32>
      tpu.vector_store %arg7[%c0_84, %c0_85, %c8_86], %139 {strides = array<i32>} : memref<1x8x32xf32, #tpu.memory_space<vmem>>, vector<1x8x8xf32>,
      %c0_87 = arith.constant 0 : index
      %c16_88 = arith.constant 16 : index
      %140 = vector.load %arg10[%c0_87, %c16_88] : memref<8x32xf32, #tpu.memory_space<vmem>>, vector<8x8xf32>
      %141 = vector.extract_strided_slice %125 {offsets = [0, 2], sizes = [8, 1], strides = [1, 1]} : vector<8x4xf32> to vector<8x1xf32>
      %142 = vector.broadcast %141 : vector<8x1xf32> to vector<8x8xf32>
      %143 = arith.mulf %140, %142 : vector<8x8xf32>
      %c0_89 = arith.constant 0 : index
      %c0_90 = arith.constant 0 : index
      %c16_91 = arith.constant 16 : index
      %144 = vector.load %arg7[%c0_89, %c0_90, %c16_91] : memref<1x8x32xf32, #tpu.memory_space<vmem>>, vector<1x8x8xf32>
      %145 = vector.shape_cast %144 : vector<1x8x8xf32> to vector<8x8xf32>
      %146 = vector.shape_cast %143 : vector<8x8xf32> to vector<1x8x8xf32>
      tpu.vector_store %arg7[%c0_89, %c0_90, %c16_91], %146 {strides = array<i32>} : memref<1x8x32xf32, #tpu.memory_space<vmem>>, vector<1x8x8xf32>,
      %c0_92 = arith.constant 0 : index
      %c24_93 = arith.constant 24 : index
      %147 = vector.load %arg10[%c0_92, %c24_93] : memref<8x32xf32, #tpu.memory_space<vmem>>, vector<8x8xf32>
      %148 = vector.extract_strided_slice %125 {offsets = [0, 3], sizes = [8, 1], strides = [1, 1]} : vector<8x4xf32> to vector<8x1xf32>
      %149 = vector.broadcast %148 : vector<8x1xf32> to vector<8x8xf32>
      %150 = arith.mulf %147, %149 : vector<8x8xf32>
      %c0_94 = arith.constant 0 : index
      %c0_95 = arith.constant 0 : index
      %c24_96 = arith.constant 24 : index
      %151 = vector.load %arg7[%c0_94, %c0_95, %c24_96] : memref<1x8x32xf32, #tpu.memory_space<vmem>>, vector<1x8x8xf32>
      %152 = vector.shape_cast %151 : vector<1x8x8xf32> to vector<8x8xf32>
      %153 = vector.shape_cast %150 : vector<8x8xf32> to vector<1x8x8xf32>
      tpu.vector_store %arg7[%c0_94, %c0_95, %c24_96], %153 {strides = array<i32>} : memref<1x8x32xf32, #tpu.memory_space<vmem>>, vector<1x8x8xf32>,
    } else {
    }
    return
  }
  func.func @transform_0(%arg0: i32, %arg1: i32, %arg2: i32) -> (i32, i32, i32, i32) {
    %c0_i32 = arith.constant 0 : i32
    %c0_i32_0 = arith.constant 0 : i32
    %c0_i32_1 = arith.constant 0 : i32
    return %c0_i32, %arg0, %arg1, %c0_i32_0 : i32, i32, i32, i32
  }
  func.func @transform_1(%arg0: i32, %arg1: i32, %arg2: i32) -> (i32, i32, i32, i32) {
    %c1_i32 = arith.constant 1 : i32
    %c0_i32 = arith.constant 0 : i32
    %c0_i32_0 = arith.constant 0 : i32
    return %c1_i32, %arg0, %arg2, %c0_i32 : i32, i32, i32, i32
  }
  func.func @transform_2(%arg0: i32, %arg1: i32, %arg2: i32) -> (i32, i32, i32, i32) {
    %c2_i32 = arith.constant 2 : i32
    %c0_i32 = arith.constant 0 : i32
    %c0_i32_0 = arith.constant 0 : i32
    return %c2_i32, %arg0, %arg2, %c0_i32 : i32, i32, i32, i32
  }
  func.func @transform_3(%arg0: i32, %arg1: i32, %arg2: i32) -> (i32, i32, i32) {
    %c0_i32 = arith.constant 0 : i32
    return %arg0, %arg1, %arg2 : i32, i32, i32
  }
  func.func @transform_4(%arg0: i32, %arg1: i32, %arg2: i32) -> (i32, i32, i32) {
    %c0_i32 = arith.constant 0 : i32
    %c0_i32_0 = arith.constant 0 : i32
    return %arg0, %arg1, %c0_i32 : i32, i32, i32
  }
}

module attributes {stable_mosaic.version = 11 : i64} {
  func.func @_linear_residual_kernel(%arg0: i32, %arg1: i32, %arg2: i32, %arg3: memref<16x32xf32, #tpu.memory_space<vmem>>, %arg4: memref<32x32xf32, #tpu.memory_space<vmem>>, %arg5: memref<1x32xf32, #tpu.memory_space<vmem>>, %arg6: memref<16x32xf32, #tpu.memory_space<vmem>>, %arg7: memref<16x32xf32, #tpu.memory_space<vmem>>, %arg8: memref<16x32xf32, #tpu.memory_space<vmem>>) attributes {dimension_semantics = [#tpu.dimension_semantics<parallel>, #tpu.dimension_semantics<parallel>, #tpu.dimension_semantics<arbitrary>], iteration_bounds = array<i64: 1, 1, 1>, scalar_prefetch = 0 : i64, scratch_operands = 1 : i64, tpu.core_type = #tpu.core_type<tc>, window_params = [{transform_indices = @transform_0, window_bounds = array<i64: 16, 32>}, {transform_indices = @transform_1, window_bounds = array<i64: 32, 32>}, {transform_indices = @transform_2, window_bounds = array<i64: 1, 32>}, {transform_indices = @transform_3, window_bounds = array<i64: 16, 32>}, {transform_indices = @transform_4, window_bounds = array<i64: 16, 32>}]} {
    %c0_i32 = arith.constant 0 : i32
    %0 = arith.cmpi eq, %arg2, %c0_i32 : i32
    %1 = arith.extui %0 : i1 to i32
    %c0_i32_0 = arith.constant 0 : i32
    %2 = arith.cmpi ne, %1, %c0_i32_0 : i32
    scf.if %2 {
      %cst_10 = arith.constant 0.000000e+00 : f32
      %12 = vector.broadcast %cst_10 : f32 to vector<16x32xf32>
      %c0_11 = arith.constant 0 : index
      %c0_12 = arith.constant 0 : index
      %13 = vector.load %arg8[%c0_11, %c0_12] : memref<16x32xf32, #tpu.memory_space<vmem>>, vector<16x32xf32>
      tpu.vector_store %arg8[%c0_11, %c0_12], %12 {strides = array<i32>} : memref<16x32xf32, #tpu.memory_space<vmem>>, vector<16x32xf32>,
    } else {
    }
    %c0 = arith.constant 0 : index
    %c0_1 = arith.constant 0 : index
    %3 = vector.load %arg8[%c0, %c0_1] : memref<16x32xf32, #tpu.memory_space<vmem>>, vector<16x32xf32>
    %c0_2 = arith.constant 0 : index
    %c0_3 = arith.constant 0 : index
    %4 = vector.load %arg3[%c0_2, %c0_3] : memref<16x32xf32, #tpu.memory_space<vmem>>, vector<16x32xf32>
    %c0_4 = arith.constant 0 : index
    %c0_5 = arith.constant 0 : index
    %5 = vector.load %arg4[%c0_4, %c0_5] : memref<32x32xf32, #tpu.memory_space<vmem>>, vector<32x32xf32>
    %cst = arith.constant dense<0.000000e+00> : vector<16x32xf32>
    %6 = tpu.matmul %4, %5, %cst {dimension_numbers = #tpu.dot_dimension_numbers<[1], [0], [0], [1], [0, 0, 1, 1], [], []>} : vector<16x32xf32>, vector<32x32xf32>, vector<16x32xf32> -> vector<16x32xf32>
    %7 = arith.addf %3, %6 : vector<16x32xf32>
    %c0_6 = arith.constant 0 : index
    %c0_7 = arith.constant 0 : index
    %8 = vector.load %arg8[%c0_6, %c0_7] : memref<16x32xf32, #tpu.memory_space<vmem>>, vector<16x32xf32>
    tpu.vector_store %arg8[%c0_6, %c0_7], %7 {strides = array<i32>} : memref<16x32xf32, #tpu.memory_space<vmem>>, vector<16x32xf32>,
    %c0_i32_8 = arith.constant 0 : i32
    %9 = arith.cmpi eq, %arg2, %c0_i32_8 : i32
    %10 = arith.extui %9 : i1 to i32
    %c0_i32_9 = arith.constant 0 : i32
    %11 = arith.cmpi ne, %10, %c0_i32_9 : i32
    scf.if %11 {
      %c0_10 = arith.constant 0 : index
      %c0_11 = arith.constant 0 : index
      %12 = vector.load %arg8[%c0_10, %c0_11] : memref<16x32xf32, #tpu.memory_space<vmem>>, vector<16x32xf32>
      %c0_12 = arith.constant 0 : index
      %c0_13 = arith.constant 0 : index
      %13 = vector.load %arg5[%c0_12, %c0_13] : memref<1x32xf32, #tpu.memory_space<vmem>>, vector<1x32xf32>
      %14 = vector.broadcast %13 : vector<1x32xf32> to vector<16x32xf32>
      %15 = arith.addf %12, %14 : vector<16x32xf32>
      %c0_14 = arith.constant 0 : index
      %c0_15 = arith.constant 0 : index
      %16 = vector.load %arg6[%c0_14, %c0_15] : memref<16x32xf32, #tpu.memory_space<vmem>>, vector<16x32xf32>
      %17 = arith.addf %15, %16 : vector<16x32xf32>
      %c0_16 = arith.constant 0 : index
      %c0_17 = arith.constant 0 : index
      %18 = vector.load %arg7[%c0_16, %c0_17] : memref<16x32xf32, #tpu.memory_space<vmem>>, vector<16x32xf32>
      tpu.vector_store %arg7[%c0_16, %c0_17], %17 {strides = array<i32>} : memref<16x32xf32, #tpu.memory_space<vmem>>, vector<16x32xf32>,
    } else {
    }
    return
  }
  func.func @transform_0(%arg0: i32, %arg1: i32, %arg2: i32) -> (i32, i32) {
    %c0_i32 = arith.constant 0 : i32
    return %arg0, %arg2 : i32, i32
  }
  func.func @transform_1(%arg0: i32, %arg1: i32, %arg2: i32) -> (i32, i32) {
    %c0_i32 = arith.constant 0 : i32
    return %arg2, %arg1 : i32, i32
  }
  func.func @transform_2(%arg0: i32, %arg1: i32, %arg2: i32) -> (i32, i32) {
    %c0_i32 = arith.constant 0 : i32
    %c0_i32_0 = arith.constant 0 : i32
    return %c0_i32, %arg1 : i32, i32
  }
  func.func @transform_3(%arg0: i32, %arg1: i32, %arg2: i32) -> (i32, i32) {
    %c0_i32 = arith.constant 0 : i32
    return %arg0, %arg1 : i32, i32
  }
  func.func @transform_4(%arg0: i32, %arg1: i32, %arg2: i32) -> (i32, i32) {
    %c0_i32 = arith.constant 0 : i32
    return %arg0, %arg1 : i32, i32
  }
}

</mosaic_0001>

<llo_original>
// kernel: transformer_prenorm_attention_block.5
$region0: #{transformer_prenorm_attention_block.5}
  #allocation0 [shape = 'u32[]', space=smem, size = 0x4, offset = 0x4, fixed_abs, tag = 'smem constant byte address 0x4 - core index']
  #allocation1 [shape = 'u32[144,128]{1,0:T(1,128)}', space=vmem, size = 0x12000, scoped, tag = 'internal scratch']
  #allocation2 [shape = 'f32[16,32]{1,0:T(8,128)}', space=vmem, size = 0x2000, scoped, tag = 'scratch operand']
  %s0 = inlined_call_operand.vmem [shape: f32[16,32], index: 0, kind: input, shape index: {}]
  %s1 = inlined_call_operand.hbm [shape: f32[3,32,32], index: 1, kind: input, shape index: {}]
  %s2 = inlined_call_operand.vmem [shape: f32[3,1,32], index: 2, kind: input, shape index: {}]
  %s3 = inlined_call_operand.vmem [shape: f32[3,16,32], index: 3, kind: output, shape index: {}]
  %s4 = sld [smem:[#allocation0]]
  $region57: #{transformer_prenorm_attention_block.5} parent=0
    _
  %s6 = ssub.s32 1, %s4
  %s7 = scalar_select 0, %s6, %s4
  $region1: #{transformer_prenorm_attention_block.5} parent=0
    #allocation3 [shape = 'u8[32768]{0}', space=vmem, size = 0x8000, scoped, tag = 'input window, operand 1']
    #allocation4 [shape = 's32[2]{0}', space=sflag, size = 0x8, scoped, tag = 'scoped memory for transformer_prenorm_attention_block.5']
    %8 = vsyncpa [#allocation4], 0
    %s9 = scalar_lea.sflag [#allocation4], 1
    %10 = vsyncpa %s9, 0
    loop: start=0, step=1, limit=5
    $region2: #{transformer_prenorm_attention_block.5} parent=1 // loop_pre_header
      _
    $region3: #{transformer_prenorm_attention_block.5} parent=1 // loop_header
      %s12 = sphi 0, %s16
      %p13 = scmp.ge.s32.totalorder %s12, 5
      %s19 = sphi 0, %s38
      %s20 = sphi 0, %s34
      %s21 = sphi 0, %s30
      %s22 = sphi 0, %s19
      %s23 = sphi 0, %s20
      %s24 = sphi 0, %s21
      %s25 = sphi 0, %s22
      %s26 = sphi 0, %s23
      %s27 = sphi 0, %s24
      %s43 = sphi 0, %s45
      %s46 = sphi 0, %s43
      %s47 = sphi 0, %s46
      %s63 = sphi 0, %s47
      %s71 = sphi 0, %s73
      %s74 = sphi 0, %s71
      %s75 = sphi 0, %s74
      %s91 = sphi 0, %s75
      %s97 = sphi 0, %s99
      %s100 = sphi 0, %s97
      %s101 = sphi 0, %s100
      %s117 = sphi 0, %s101
      %s125 = sphi 0, %s127
      %s128 = sphi 0, %s125
      %s129 = sphi 0, %s128
      %s145 = sphi 0, %s129
    $region4: #{transformer_prenorm_attention_block.5} parent=1 // loop_header_branch
      %15 = sbr.rel (%p13) target = $region8
    $region5: #{transformer_prenorm_attention_block.5} parent=1 // loop_body
      %s17 = ssub.s32 %s12, 1
      %s18 = ssub.s32 %s12, 2
      %s28 = sadd.s32 1, %s21
      %p29 = scmp.ge.s32.totalorder %s28, 1
      %s30 = scalar_select %p29, 0, %s28
      %s31 = sadd.s32 1, %s20
      %s32 = scalar_select %p29, %s31, %s20
      %p33 = scmp.ge.s32.totalorder %s32, 3
      %s34 = scalar_select %p33, 0, %s32
      %s35 = sadd.s32 1, %s19
      %s36 = scalar_select %p33, %s35, %s19
      %p37 = scmp.ge.s32.totalorder %s36, 1
      %s38 = scalar_select %p37, 0, %s36
      %s39 = ssub.s32 %s19, %s38
      %s40 = ssub.s32 %s21, %s30
      %s41 = sor.u32 %s39, %s40
      %p42 = scmp.eq.s32.totalorder %s41, 0
      %s44 = sadd.s32 %s43, 1
      %s45 = scalar_select %p42, %s43, %s44
      %p48 = pneg %p42
      %p49 = scmp.eq.s32.totalorder %s12, 2
      %p50 = por %p48, %p49
      %p51 = scmp.ne.s32.totalorder %s43, %s46
      %p52 = scmp.eq.s32.totalorder %s12, 0
      %p53 = por %p51, %p52
      %p54 = scmp.ne.s32.totalorder %s43, %s46
      %p55 = scmp.eq.s32.totalorder %s17, 2
      %p56 = por %p54, %p55
      %p57 = scmp.ne.s32.totalorder %s46, %s47
      %p58 = scmp.eq.s32.totalorder %s17, 0
      %p59 = por %p57, %p58
      %p60 = scmp.ne.s32.totalorder %s46, %s47
      %p61 = scmp.eq.s32.totalorder %s18, 2
      %p62 = por %p60, %p61
      %p64 = scmp.ne.s32.totalorder %s47, %s63
      %p65 = scmp.eq.s32.totalorder %s18, 0
      %p66 = por %p64, %p65
      %s67 = ssub.s32 %s20, %s34
      %s68 = ssub.s32 %s21, %s30
      %s69 = sor.u32 %s67, %s68
      %p70 = scmp.eq.s32.totalorder %s69, 0
      %s72 = sadd.s32 %s71, 1
      %s73 = scalar_select %p70, %s71, %s72
      %p76 = pneg %p70
      %p77 = scmp.eq.s32.totalorder %s12, 2
      %p78 = por %p76, %p77
      %p79 = scmp.ne.s32.totalorder %s71, %s74
      %p80 = scmp.eq.s32.totalorder %s12, 0
      %p81 = por %p79, %p80
      %p82 = scmp.ne.s32.totalorder %s71, %s74
      %p83 = scmp.eq.s32.totalorder %s17, 2
      %p84 = por %p82, %p83
      %p85 = scmp.ne.s32.totalorder %s74, %s75
      %p86 = scmp.eq.s32.totalorder %s17, 0
      %p87 = por %p85, %p86
      %p88 = scmp.ne.s32.totalorder %s74, %s75
      %p89 = scmp.eq.s32.totalorder %s18, 2
      %p90 = por %p88, %p89
      %p92 = scmp.ne.s32.totalorder %s75, %s91
      %p93 = scmp.eq.s32.totalorder %s18, 0
      %p94 = por %p92, %p93
      %s95 = ssub.s32 %s20, %s34
      %p96 = scmp.eq.s32.totalorder %s95, 0
      %s98 = sadd.s32 %s97, 1
      %s99 = scalar_select %p96, %s97, %s98
      %p102 = pneg %p96
      %p103 = scmp.eq.s32.totalorder %s12, 2
      %p104 = por %p102, %p103
      %p105 = scmp.ne.s32.totalorder %s97, %s100
      %p106 = scmp.eq.s32.totalorder %s12, 0
      %p107 = por %p105, %p106
      %p108 = scmp.ne.s32.totalorder %s97, %s100
      %p109 = scmp.eq.s32.totalorder %s17, 2
      %p110 = por %p108, %p109
      %p111 = scmp.ne.s32.totalorder %s100, %s101
      %p112 = scmp.eq.s32.totalorder %s17, 0
      %p113 = por %p111, %p112
      %p114 = scmp.ne.s32.totalorder %s100, %s101
      %p115 = scmp.eq.s32.totalorder %s18, 2
      %p116 = por %p114, %p115
      %p118 = scmp.ne.s32.totalorder %s101, %s117
      %p119 = scmp.eq.s32.totalorder %s18, 0
      %p120 = por %p118, %p119
      %s121 = ssub.s32 %s20, %s34
      %s122 = ssub.s32 %s19, %s38
      %s123 = sor.u32 %s121, %s122
      %p124 = scmp.eq.s32.totalorder %s123, 0
      %s126 = sadd.s32 %s125, 1
      %s127 = scalar_select %p124, %s125, %s126
      %p130 = pneg %p124
      %p131 = scmp.eq.s32.totalorder %s12, 2
      %p132 = por %p130, %p131
      %p133 = scmp.ne.s32.totalorder %s125, %s128
      %p134 = scmp.eq.s32.totalorder %s12, 0
      %p135 = por %p133, %p134
      %p136 = scmp.ne.s32.totalorder %s125, %s128
      %p137 = scmp.eq.s32.totalorder %s17, 2
      %p138 = por %p136, %p137
      %p139 = scmp.ne.s32.totalorder %s128, %s129
      %p140 = scmp.eq.s32.totalorder %s17, 0
      %p141 = por %p139, %p140
      %p142 = scmp.ne.s32.totalorder %s128, %s129
      %p143 = scmp.eq.s32.totalorder %s18, 2
      %p144 = por %p142, %p143
      %p146 = scmp.ne.s32.totalorder %s129, %s145
      %p147 = scmp.eq.s32.totalorder %s18, 0
      %p148 = por %p146, %p147
      %p149 = scmp.le.s32.totalorder 1, %s12
      %p150 = scmp.lt.s32.totalorder %s12, 4
      %p151 = pnand %p149, %p150
      %p152 = pneg %p151
      // Predicated region
      $region9: #{transformer_prenorm_attention_block.5} parent=5 // pred_check
        _
      $region10: #{transformer_prenorm_attention_block.5} parent=5 // pred_check_branch
        %154 = sbr.rel (%p151) target = $region12
      $region11: #{transformer_prenorm_attention_block.5} parent=5 // pred_region
        %s155 = ssub.s32 %s12, 1
        // Predicated region
        $region13: #{transformer_prenorm_attention_block.5} parent=11 // pred_check
          %p156 = pneg %p59
        $region14: #{transformer_prenorm_attention_block.5} parent=11 // pred_check_branch
          %158 = sbr.rel (%p156) target = $region16
        $region15: #{transformer_prenorm_attention_block.5} parent=11 // pred_region
          %s159 = smul.u32 2, %s22
          %p160 = scmp.lt.s32.totalorder %s159, 1
          %s161 = scalar_select %p160, %s159, 1
          %p162 = scmp.lt.s32.totalorder %s24, 0
          %s163 = scalar_select %p162, %s24, 0
          %s164 = sadd.s32 %s163, %s161
          %s165 = smul.addr %s164, 8
          %s166 = scalar_lea.vmem %s0, %s165
          %s167 = smul.u32 2, %s22
        $region16: #{transformer_prenorm_attention_block.5} parent=11 // pred_fallthru
          _
      $region12: #{transformer_prenorm_attention_block.5} parent=5 // pred_fallthru
        _
      %p168 = scmp.lt.s32.totalorder %s12, 3
      // Predicated region
      $region17: #{transformer_prenorm_attention_block.5} parent=5 // pred_check
        %p169 = pneg %p168
      $region18: #{transformer_prenorm_attention_block.5} parent=5 // pred_check_branch
        %171 = sbr.rel (%p169) target = $region20
      $region19: #{transformer_prenorm_attention_block.5} parent=5 // pred_region
        // Predicated region
        $region21: #{transformer_prenorm_attention_block.5} parent=19 // pred_check
          %p172 = pneg %p81
        $region22: #{transformer_prenorm_attention_block.5} parent=19 // pred_check_branch
          %174 = sbr.rel (%p172) target = $region24
        $region23: #{transformer_prenorm_attention_block.5} parent=19 // pred_region
          %s175 = sand.u32 %s71, 1
          %s176 = scalar_lea.sflag [#allocation4], %s175
          %s177 = sand.u32 %s71, 1
          %s178 = smul.addr %s177, 32
          %s179 = scalar_lea.vmem [#allocation3], %s178
          %s180 = smul.u32 4, %s21
          %s182 = ssub.s32 512, 512
          %183 = vsyncadd %s176, %s182
          %s184 = smul.addr %s20, 4
          %s185 = sadd.s32 %s180, %s184
          %s186 = smul.addr %s185, 128
          %s187 = scalar_lea.hbm %s1, %s186
          %s188 = sshll.u32 %s179, 4
          %s189 = int_to_ptr.vmem [resolvable:$true] %s188
          %194 = dma.hbm_to_vmem [thread:$0]  %s187, 512, %s189, %s176, 128, 128, 8
        $region24: #{transformer_prenorm_attention_block.5} parent=19 // pred_fallthru
          _
        // Predicated region
        $region25: #{transformer_prenorm_attention_block.5} parent=19 // pred_check
          %p195 = pneg %p107
        $region26: #{transformer_prenorm_attention_block.5} parent=19 // pred_check_branch
          %197 = sbr.rel (%p195) target = $region28
        $region27: #{transformer_prenorm_attention_block.5} parent=19 // pred_region
          %p198 = scmp.lt.s32.totalorder %s20, 2
          %s199 = scalar_select %p198, %s20, 2
          %s200 = scalar_lea.vmem %s2, %s199
        $region28: #{transformer_prenorm_attention_block.5} parent=19 // pred_fallthru
          _
      $region20: #{transformer_prenorm_attention_block.5} parent=5 // pred_fallthru
        _
      %p201 = scmp.le.s32.totalorder 1, %s12
      %p202 = scmp.lt.s32.totalorder %s12, 4
      %p203 = pnand %p201, %p202
      %p204 = pneg %p203
      // Predicated region
      $region29: #{transformer_prenorm_attention_block.5} parent=5 // pred_check
        _
      $region30: #{transformer_prenorm_attention_block.5} parent=5 // pred_check_branch
        %206 = sbr.rel (%p203) target = $region32
      $region31: #{transformer_prenorm_attention_block.5} parent=5 // pred_region
        %s207 = ssub.s32 %s12, 1
        %s208 = sand.u32 %s74, 1
        %s209 = scalar_lea.sflag [#allocation4], %s208
        %s210 = sand.u32 %s74, 1
        %s211 = smul.addr %s210, 32
        %s212 = scalar_lea.vmem [#allocation3], %s211
        // Predicated region
        $region33: #{transformer_prenorm_attention_block.5} parent=31 // pred_check
          %p213 = pneg %p87
        $region34: #{transformer_prenorm_attention_block.5} parent=31 // pred_check_branch
          %215 = sbr.rel (%p213) target = $region36
        $region35: #{transformer_prenorm_attention_block.5} parent=31 // pred_region
          %216 = dma.done %s209, 512
        $region36: #{transformer_prenorm_attention_block.5} parent=31 // pred_fallthru
          _
        %s217 = smul.u32 2, %s22
        %p218 = scmp.lt.s32.totalorder %s217, 1
        %s219 = scalar_select %p218, %s217, 1
        %p220 = scmp.lt.s32.totalorder %s24, 0
        %s221 = scalar_select %p220, %s24, 0
        %s222 = sadd.s32 %s221, %s219
        %s223 = smul.addr %s222, 8
        %s224 = scalar_lea.vmem %s0, %s223
        %p225 = pneg %p59
        %p226 = pneg %p56
        %s227 = sand.u32 %s74, 1
        %s228 = scalar_lea.sflag [#allocation4], %s227
        %s229 = sand.u32 %s74, 1
        %s230 = smul.addr %s229, 32
        %s231 = scalar_lea.vmem [#allocation3], %s230
        %p232 = pneg %p87
        %p233 = pneg %p84
        %p234 = scmp.lt.s32.totalorder %s23, 2
        %s235 = scalar_select %p234, %s23, 2
        %s236 = scalar_lea.vmem %s2, %s235
        %p237 = pneg %p113
        %p238 = pneg %p110
        %p239 = pneg %p141
        %p240 = pneg %p138
        %s241 = smul.u32 2, %s22
        %p242 = scmp.lt.s32.totalorder %s23, 2
        %s243 = scalar_select %p242, %s23, 2
        %p244 = scmp.lt.s32.totalorder %s241, 1
        %s245 = scalar_select %p244, %s241, 1
        %s246 = smul.addr %s243, 2
        %s247 = sadd.s32 %s245, %s246
        %s248 = smul.addr %s247, 8
        %s249 = scalar_lea.vmem %s3, %s248
        %s250 = smul.u32 2, %s22
        %p251 = scmp.lt.s32.totalorder %s250, 1
        %s252 = scalar_select %p251, %s250, 1
        %p253 = scmp.lt.s32.totalorder %s24, 0
        %s254 = scalar_select %p253, %s24, 0
        %s255 = sadd.s32 %s254, %s252
        %s256 = smul.addr %s255, 8
        %s257 = scalar_lea.vmem %s0, %s256
        %s258 = smul.u32 2, %s22
        %s259 = smul.u32 4, %s24
        %p260 = scmp.lt.s32.totalorder %s23, 2
        %s261 = scalar_select %p260, %s23, 2
        %s262 = scalar_lea.vmem %s2, %s261
        %s263 = smul.u32 2, %s22
        %p264 = scmp.lt.s32.totalorder %s23, 2
        %s265 = scalar_select %p264, %s23, 2
        %p266 = scmp.lt.s32.totalorder %s263, 1
        %s267 = scalar_select %p266, %s263, 1
        %s268 = smul.addr %s265, 2
        %s269 = sadd.s32 %s267, %s268
        %s270 = smul.addr %s269, 8
        %s271 = scalar_lea.vmem %s3, %s270
        %s272 = smul.u32 2, %s22
        %p273 = scmp.eq.s32.totalorder %s24, 0
        // Predicated region
        $region37: #{transformer_prenorm_attention_block.5} parent=31 // pred_check
          %p274 = pneg %p273
        $region38: #{transformer_prenorm_attention_block.5} parent=31 // pred_check_branch
          %276 = sbr.rel (%p274) target = $region40
        $region39: #{transformer_prenorm_attention_block.5} parent=31 // pred_region
          %vm277 = vcmask 261120
          %278 = vst.msk [vmem:[#allocation2] sm:$0xff] %vm277, 0.0
          %279 = vst.msk [vmem:[#allocation2 + $0x8] sm:$0xff] %vm277, 0.0
        $region40: #{transformer_prenorm_attention_block.5} parent=31 // pred_fallthru
          _
        %v280 = vld [vmem:[#allocation2] sm:$0xff]
        %v281 = vld [vmem:[#allocation2 + $0x8] sm:$0xff]
        %v282 = vld [vmem:[%s257] sm:$0xff]
        %v283 = vld [vmem:[%s257 + $0x8] sm:$0xff]
        %v284 = vld [vmem:[%s212] sm:$0xff]
        %v285 = vld [vmem:[%s212 + $0x8] sm:$0xff]
        %v286 = vld [vmem:[%s212 + $0x10] sm:$0xff]
        %v287 = vld [vmem:[%s212 + $0x18] sm:$0xff]
        %vm288 = vcmask 261120
        %v290 = vsel %vm288, %v282, 0
        %v293 = vsel %vm288, %v283, 0
        %295 = vmatprep.subr.mxu0 0.0
        %296 = vmatpush1.msra.mxu0 0.0
        %297 = vmatprep.subr.mxu0 0.0
        %298 = vmatpush1.msra.mxu0 0.0
        %299 = vmatprep.subr.mxu0 0.0
        %300 = vmatpush1.msra.mxu0 0.0
        %301 = vmatprep.subr.mxu0 0.0
        %302 = vmatpush1.msra.mxu0 0.0
        %303 = vmatprep.subr.mxu0 0.0
        %304 = vmatpush1.msra.mxu0 0.0
        %305 = vmatprep.subr.mxu0 0.0
        %306 = vmatpush1.msra.mxu0 0.0
        %307 = vmatprep.subr.mxu0 0.0
        %308 = vmatpush1.msra.mxu0 0.0
        %309 = vmatprep.subr.mxu0 0.0
        %310 = vmatpush1.msra.mxu0 0.0
        %311 = vmatprep.subr.mxu0 0.0
        %312 = vmatpush1.msra.mxu0 0.0
        %313 = vmatprep.subr.mxu0 0.0
        %314 = vmatpush1.msra.mxu0 0.0
        %315 = vmatprep.subr.mxu0 0.0
        %316 = vmatpush1.msra.mxu0 0.0
        %317 = vmatprep.subr.mxu0 0.0
        %318 = vmatpush1.msra.mxu0 0.0
        %319 = vmatprep.subr.mxu0 0.0
        %320 = vmatpush1.msra.mxu0 %v287
        %321 = vmatprep.subr.mxu0 0.0
        %322 = vmatpush1.msra.mxu0 %v286
        %323 = vmatprep.subr.mxu0 0.0
        %324 = vmatpush1.msra.mxu0 %v285
        %325 = vmatprep.subr.mxu0 0.0
        %326 = vmatpush1.msra.mxu0 %v284
        %327 = vmatprep.subr.mxu0 0.0
        %328 = vmatpush2.msra.mxu0 0.0
        %329 = vmatprep.subr.mxu0 0.0
        %330 = vmatpush2.msra.mxu0 0.0
        %331 = vmatprep.subr.mxu0 0.0
        %332 = vmatpush2.msra.mxu0 0.0
        %333 = vmatprep.subr.mxu0 0.0
        %334 = vmatpush2.msra.mxu0 0.0
        %335 = vmatprep.subr.mxu0 0.0
        %336 = vmatpush2.msra.mxu0 0.0
        %337 = vmatprep.subr.mxu0 0.0
        %338 = vmatpush2.msra.mxu0 0.0
        %339 = vmatprep.subr.mxu0 0.0
        %340 = vmatpush2.msra.mxu0 0.0
        %341 = vmatprep.subr.mxu0 0.0
        %342 = vmatpush2.msra.mxu0 0.0
        %343 = vmatprep.subr.mxu0 0.0
        %344 = vmatpush2.msra.mxu0 0.0
        %345 = vmatprep.subr.mxu0 0.0
        %346 = vmatpush2.msra.mxu0 0.0
        %347 = vmatprep.subr.mxu0 0.0
        %348 = vmatpush2.msra.mxu0 0.0
        %349 = vmatprep.subr.mxu0 0.0
        %350 = vmatpush2.msra.mxu0 0.0
        %351 = vmatprep.subr.mxu0 0.0
        %352 = vmatpush2.msra.mxu0 0.0
        %353 = vmatprep.subr.mxu0 0.0
        %354 = vmatpush2.msra.mxu0 0.0
        %355 = vmatprep.subr.mxu0 0.0
        %356 = vmatpush2.msra.mxu0 0.0
        %357 = vmatprep.subr.mxu0 0.0
        %358 = vmatpush2.msra.mxu0 0.0
        %359 = vmatprep.mubr.f32.mxu0 0.0
        %360 = vmatmul.mubr.f32.gmra.mxu0 %v290
        %v361 = vpop.f32.mrf.mxu0
        %v362 = vadd.f32 0.0, %v361
        %v363 = vpop.f32.mrf.mxu0
        %364 = vmatprep.mubr.f32.mxu0 0.0
        %365 = vmatmul.mubr.f32.gmra.mxu0 %v293
        %v366 = vpop.f32.mrf.mxu0
        %v367 = vadd.f32 0.0, %v366
        %v368 = vpop.f32.mrf.mxu0
        %369 = vdwg.mxu0
        %v370 = vadd.f32 %v280, %v362
        %v371 = vadd.f32 %v281, %v367
        %372 = vst.msk [vmem:[#allocation2] sm:$0xff] %vm288, %v370
        %373 = vst.msk [vmem:[#allocation2 + $0x8] sm:$0xff] %vm288, %v371
        // Predicated region
        $region41: #{transformer_prenorm_attention_block.5} parent=31 // pred_check
          %p374 = pneg %p273
        $region42: #{transformer_prenorm_attention_block.5} parent=31 // pred_check_branch
          %376 = sbr.rel (%p374) target = $region44
        $region43: #{transformer_prenorm_attention_block.5} parent=31 // pred_region
          %v377 = vld [vmem:[#allocation2] sm:$0xff]
          %v378 = vld [vmem:[#allocation2 + $0x8] sm:$0xff]
          %v379 = vld [vmem:[%s262] sm:$0x1]
          %v381 = vlaneseq
          %v382 = vshrl.u32 %v381, 7
          %v383 = vsub.s32 0, %v382
          %v384 = vrot.slane %v379, %v383
          %v386 = vadd.f32 %v377, %v384
          %v387 = vadd.f32 %v378, %v384
          %388 = vst.msk [vmem:[%s271] sm:$0xff] %vm288, %v386
          %389 = vst.msk [vmem:[%s271 + $0x8] sm:$0xff] %vm288, %v387
        $region44: #{transformer_prenorm_attention_block.5} parent=31 // pred_fallthru
          _
        %s390 = smul.u32 2, %s22
        %p391 = scmp.lt.s32.totalorder %s23, 2
        %s392 = scalar_select %p391, %s23, 2
        %p393 = scmp.lt.s32.totalorder %s390, 1
        %s394 = scalar_select %p393, %s390, 1
        %s395 = smul.addr %s392, 2
        %s396 = sadd.s32 %s394, %s395
        %s397 = smul.addr %s396, 8
        %s398 = scalar_lea.vmem %s3, %s397
        // Predicated region
        $region45: #{transformer_prenorm_attention_block.5} parent=31 // pred_check
          %p399 = pneg %p138
        $region46: #{transformer_prenorm_attention_block.5} parent=31 // pred_check_branch
          %401 = sbr.rel (%p399) target = $region48
        $region47: #{transformer_prenorm_attention_block.5} parent=31 // pred_region
          %s402 = smul.u32 2, %s22
        $region48: #{transformer_prenorm_attention_block.5} parent=31 // pred_fallthru
          _
      $region32: #{transformer_prenorm_attention_block.5} parent=5 // pred_fallthru
        _
      %p403 = scmp.le.s32.totalorder 2, %s12
      // Predicated region
      $region49: #{transformer_prenorm_attention_block.5} parent=5 // pred_check
        %p404 = pneg %p403
      $region50: #{transformer_prenorm_attention_block.5} parent=5 // pred_check_branch
        %406 = sbr.rel (%p404) target = $region52
      $region51: #{transformer_prenorm_attention_block.5} parent=5 // pred_region
        %s407 = ssub.s32 %s12, 2
        // Predicated region
        $region53: #{transformer_prenorm_attention_block.5} parent=51 // pred_check
          %p408 = pneg %p144
        $region54: #{transformer_prenorm_attention_block.5} parent=51 // pred_check_branch
          %410 = sbr.rel (%p408) target = $region56
        $region55: #{transformer_prenorm_attention_block.5} parent=51 // pred_region
          %s411 = smul.u32 2, %s25
          %p412 = scmp.lt.s32.totalorder %s26, 2
          %s413 = scalar_select %p412, %s26, 2
          %p414 = scmp.lt.s32.totalorder %s411, 1
          %s415 = scalar_select %p414, %s411, 1
          %s416 = smul.addr %s413, 2
          %s417 = sadd.s32 %s415, %s416
          %s418 = smul.addr %s417, 8
          %s419 = scalar_lea.vmem %s3, %s418
        $region56: #{transformer_prenorm_attention_block.5} parent=51 // pred_fallthru
          _
      $region52: #{transformer_prenorm_attention_block.5} parent=5 // pred_fallthru
        _
    $region6: #{transformer_prenorm_attention_block.5} parent=1 // loop_footer
      %s16 = sadd.s32 1, %s12
    $region7: #{transformer_prenorm_attention_block.5} parent=1 // loop_footer_branch
      %11 = sbr.rel target = $region3
    $region8: #{transformer_prenorm_attention_block.5} parent=1 // loop_exit
      _
    %420 = vsyncpa [#allocation4], 1
    %s421 = scalar_lea.sflag [#allocation4], 1
    %422 = vsyncpa %s421, 1

// kernel: transformer_prenorm_attention_block.4
$region0: #{transformer_prenorm_attention_block.4}
  #allocation0 [shape = 'u32[]', space=smem, size = 0x4, offset = 0x4, fixed_abs, tag = 'smem constant byte address 0x4 - core index']
  #allocation1 [shape = 'u32[144,128]{1,0:T(1,128)}', space=vmem, size = 0x12000, scoped, tag = 'internal scratch']
  %s0 = inlined_call_operand.vmem [shape: f32[16,32], index: 0, kind: input, shape index: {}]
  %s1 = inlined_call_operand.vmem [shape: f32[1,32], index: 1, kind: input, shape index: {}]
  %s2 = inlined_call_operand.vmem [shape: f32[1,32], index: 2, kind: input, shape index: {}]
  %s3 = inlined_call_operand.vmem [shape: f32[16,32], index: 3, kind: output, shape index: {}]
  %s4 = sld [smem:[#allocation0]]
  $region22: #{transformer_prenorm_attention_block.4} parent=0
    _
  %s6 = ssub.s32 1, %s4
  %s7 = scalar_select 0, %s6, %s4
  // Predicated region
  $region2: #{transformer_prenorm_attention_block.4} parent=0 // pred_check
    _
  $region3: #{transformer_prenorm_attention_block.4} parent=0 // pred_check_branch
    %9 = sbr.rel (0) target = $region5
  $region4: #{transformer_prenorm_attention_block.4} parent=0 // pred_region
    _
  $region5: #{transformer_prenorm_attention_block.4} parent=0 // pred_fallthru
    _
  // Predicated region
  $region6: #{transformer_prenorm_attention_block.4} parent=0 // pred_check
    _
  $region7: #{transformer_prenorm_attention_block.4} parent=0 // pred_check_branch
    %11 = sbr.rel (0) target = $region9
  $region8: #{transformer_prenorm_attention_block.4} parent=0 // pred_region
    _
  $region9: #{transformer_prenorm_attention_block.4} parent=0 // pred_fallthru
    _
  // Predicated region
  $region10: #{transformer_prenorm_attention_block.4} parent=0 // pred_check
    _
  $region11: #{transformer_prenorm_attention_block.4} parent=0 // pred_check_branch
    %13 = sbr.rel (0) target = $region13
  $region12: #{transformer_prenorm_attention_block.4} parent=0 // pred_region
    _
  $region13: #{transformer_prenorm_attention_block.4} parent=0 // pred_fallthru
    _
  %v14 = vld [vmem:[%s0] sm:$0xff]
  %v15 = vld [vmem:[%s0 + $0x8] sm:$0xff]
  %vm16 = vcmask 261120
  %v17 = vsel %vm16, %v14, 0.0
  %18 = vadd.xlane.f32.xlu0 %v17
  %v19 = vpop.xlane.xlu0 %18
  %v20 = vsel %vm16, %v15, 0.0
  %21 = vadd.xlane.f32.xlu0 %v20
  %v22 = vpop.xlane.xlu0 %21
  %v23 = vrcp.pop 32.0
  %v24 = vmul.f32 %v19, %v23
  %v25 = vmul.f32 %v22, %v23
  %v26 = vsub.f32 %v14, %v24
  %v27 = vsub.f32 %v15, %v25
  %v28 = vmul.f32 %v26, %v26
  %v29 = vmul.f32 %v27, %v27
  %v30 = vsel %vm16, %v28, 0.0
  %31 = vadd.xlane.f32.xlu0 %v30
  %v32 = vpop.xlane.xlu0 %31
  %v33 = vsel %vm16, %v29, 0.0
  %34 = vadd.xlane.f32.xlu0 %v33
  %v35 = vpop.xlane.xlu0 %34
  %v36 = vmul.f32 %v32, %v23
  %v37 = vmul.f32 %v35, %v23
  %v38 = vadd.f32 %v36, 1e-05
  %v39 = vadd.f32 %v37, 1e-05
  %v40 = vrsqrt.pop %v38
  %v41 = vrsqrt.pop %v39
  %v42 = vmul.f32 %v26, %v40
  %v43 = vmul.f32 %v27, %v41
  %v44 = vld [vmem:[%s1] sm:$0x1]
  %v46 = vlaneseq
  %v47 = vshrl.u32 %v46, 7
  %v48 = vsub.s32 0, %v47
  %v49 = vrot.slane %v44, %v48
  %v51 = vmul.f32 %v42, %v49
  %v52 = vmul.f32 %v43, %v49
  %v53 = vld [vmem:[%s2] sm:$0x1]
  %v55 = vlaneseq
  %v56 = vshrl.u32 %v55, 7
  %v57 = vsub.s32 0, %v56
  %v58 = vrot.slane %v53, %v57
  %v60 = vadd.f32 %v51, %v58
  %v61 = vadd.f32 %v52, %v58
  %62 = vst.msk [vmem:[%s3] sm:$0xff] %vm16, %v60
  %63 = vst.msk [vmem:[%s3 + $0x8] sm:$0xff] %vm16, %v61
  // Predicated region
  $region14: #{transformer_prenorm_attention_block.4} parent=0 // pred_check
    _
  $region15: #{transformer_prenorm_attention_block.4} parent=0 // pred_check_branch
    %65 = sbr.rel (0) target = $region17
  $region16: #{transformer_prenorm_attention_block.4} parent=0 // pred_region
    _
  $region17: #{transformer_prenorm_attention_block.4} parent=0 // pred_fallthru
    _
  // Predicated region
  $region18: #{transformer_prenorm_attention_block.4} parent=0 // pred_check
    _
  $region19: #{transformer_prenorm_attention_block.4} parent=0 // pred_check_branch
    %67 = sbr.rel (0) target = $region21
  $region20: #{transformer_prenorm_attention_block.4} parent=0 // pred_region
    _
  $region21: #{transformer_prenorm_attention_block.4} parent=0 // pred_fallthru
    _

// kernel: transformer_prenorm_attention_block.7
$region0: #{transformer_prenorm_attention_block.7}
  #allocation0 [shape = 'u32[]', space=smem, size = 0x4, offset = 0x4, fixed_abs, tag = 'smem constant byte address 0x4 - core index']
  #allocation1 [shape = 'u32[144,128]{1,0:T(1,128)}', space=vmem, size = 0x12000, scoped, tag = 'internal scratch']
  #allocation2 [shape = 'f32[16,32]{1,0:T(8,128)}', space=vmem, size = 0x2000, scoped, tag = 'scratch operand']
  %s0 = inlined_call_operand.vmem [shape: f32[16,32], index: 0, kind: input, shape index: {}]
  %s1 = inlined_call_operand.vmem [shape: f32[32,32], index: 1, kind: input, shape index: {}]
  %s2 = inlined_call_operand.vmem [shape: f32[1,32], index: 2, kind: input, shape index: {}]
  %s3 = inlined_call_operand.vmem [shape: f32[16,32], index: 3, kind: input, shape index: {}]
  %s4 = inlined_call_operand.hbm [shape: f32[16,32], index: 4, kind: output, shape index: {}]
  %s5 = sld [smem:[#allocation0]]
  $region34: #{transformer_prenorm_attention_block.7} parent=0
    _
  %s7 = ssub.s32 1, %s5
  %s8 = scalar_select 0, %s7, %s5
  $region1: #{transformer_prenorm_attention_block.7} parent=0
    #allocation3 [shape = 'u8[8192]{0}', space=vmem, size = 0x2000, scoped, tag = 'output window, operand 0, single buffered']
    #allocation4 [shape = 's32[1]{0}', space=sflag, size = 0x4, scoped, tag = 'scoped memory for transformer_prenorm_attention_block.7']
    %9 = vsyncpa [#allocation4], 0
    // Predicated region
    $region2: #{transformer_prenorm_attention_block.7} parent=1 // pred_check
      _
    $region3: #{transformer_prenorm_attention_block.7} parent=1 // pred_check_branch
      %11 = sbr.rel (0) target = $region5
    $region4: #{transformer_prenorm_attention_block.7} parent=1 // pred_region
      _
    $region5: #{transformer_prenorm_attention_block.7} parent=1 // pred_fallthru
      _
    // Predicated region
    $region6: #{transformer_prenorm_attention_block.7} parent=1 // pred_check
      _
    $region7: #{transformer_prenorm_attention_block.7} parent=1 // pred_check_branch
      %13 = sbr.rel (0) target = $region9
    $region8: #{transformer_prenorm_attention_block.7} parent=1 // pred_region
      _
    $region9: #{transformer_prenorm_attention_block.7} parent=1 // pred_fallthru
      _
    // Predicated region
    $region10: #{transformer_prenorm_attention_block.7} parent=1 // pred_check
      _
    $region11: #{transformer_prenorm_attention_block.7} parent=1 // pred_check_branch
      %15 = sbr.rel (0) target = $region13
    $region12: #{transformer_prenorm_attention_block.7} parent=1 // pred_region
      _
    $region13: #{transformer_prenorm_attention_block.7} parent=1 // pred_fallthru
      _
    // Predicated region
    $region14: #{transformer_prenorm_attention_block.7} parent=1 // pred_check
      _
    $region15: #{transformer_prenorm_attention_block.7} parent=1 // pred_check_branch
      %17 = sbr.rel (0) target = $region17
    $region16: #{transformer_prenorm_attention_block.7} parent=1 // pred_region
      _
    $region17: #{transformer_prenorm_attention_block.7} parent=1 // pred_fallthru
      _
    %p18 = scmp.eq.s32.totalorder 0, 0
    // Predicated region
    $region18: #{transformer_prenorm_attention_block.7} parent=1 // pred_check
      %p19 = pneg %p18
    $region19: #{transformer_prenorm_attention_block.7} parent=1 // pred_check_branch
      %21 = sbr.rel (%p19) target = $region21
    $region20: #{transformer_prenorm_attention_block.7} parent=1 // pred_region
      %vm22 = vcmask 261120
      %23 = vst.msk [vmem:[#allocation2] sm:$0xff] %vm22, 0.0
      %24 = vst.msk [vmem:[#allocation2 + $0x8] sm:$0xff] %vm22, 0.0
    $region21: #{transformer_prenorm_attention_block.7} parent=1 // pred_fallthru
      _
    %v25 = vld [vmem:[#allocation2] sm:$0xff]
    %v26 = vld [vmem:[#allocation2 + $0x8] sm:$0xff]
    %v27 = vld [vmem:[%s0] sm:$0xff]
    %v28 = vld [vmem:[%s0 + $0x8] sm:$0xff]
    %v29 = vld [vmem:[%s1] sm:$0xff]
    %v30 = vld [vmem:[%s1 + $0x8] sm:$0xff]
    %v31 = vld [vmem:[%s1 + $0x10] sm:$0xff]
    %v32 = vld [vmem:[%s1 + $0x18] sm:$0xff]
    %vm33 = vcmask 261120
    %v35 = vsel %vm33, %v27, 0
    %v38 = vsel %vm33, %v28, 0
    %40 = vmatprep.subr.mxu0 0.0
    %41 = vmatpush1.msra.mxu0 0.0
    %42 = vmatprep.subr.mxu0 0.0
    %43 = vmatpush1.msra.mxu0 0.0
    %44 = vmatprep.subr.mxu0 0.0
    %45 = vmatpush1.msra.mxu0 0.0
    %46 = vmatprep.subr.mxu0 0.0
    %47 = vmatpush1.msra.mxu0 0.0
    %48 = vmatprep.subr.mxu0 0.0
    %49 = vmatpush1.msra.mxu0 0.0
    %50 = vmatprep.subr.mxu0 0.0
    %51 = vmatpush1.msra.mxu0 0.0
    %52 = vmatprep.subr.mxu0 0.0
    %53 = vmatpush1.msra.mxu0 0.0
    %54 = vmatprep.subr.mxu0 0.0
    %55 = vmatpush1.msra.mxu0 0.0
    %56 = vmatprep.subr.mxu0 0.0
    %57 = vmatpush1.msra.mxu0 0.0
    %58 = vmatprep.subr.mxu0 0.0
    %59 = vmatpush1.msra.mxu0 0.0
    %60 = vmatprep.subr.mxu0 0.0
    %61 = vmatpush1.msra.mxu0 0.0
    %62 = vmatprep.subr.mxu0 0.0
    %63 = vmatpush1.msra.mxu0 0.0
    %64 = vmatprep.subr.mxu0 0.0
    %65 = vmatpush1.msra.mxu0 %v32
    %66 = vmatprep.subr.mxu0 0.0
    %67 = vmatpush1.msra.mxu0 %v31
    %68 = vmatprep.subr.mxu0 0.0
    %69 = vmatpush1.msra.mxu0 %v30
    %70 = vmatprep.subr.mxu0 0.0
    %71 = vmatpush1.msra.mxu0 %v29
    %72 = vmatprep.subr.mxu0 0.0
    %73 = vmatpush2.msra.mxu0 0.0
    %74 = vmatprep.subr.mxu0 0.0
    %75 = vmatpush2.msra.mxu0 0.0
    %76 = vmatprep.subr.mxu0 0.0
    %77 = vmatpush2.msra.mxu0 0.0
    %78 = vmatprep.subr.mxu0 0.0
    %79 = vmatpush2.msra.mxu0 0.0
    %80 = vmatprep.subr.mxu0 0.0
    %81 = vmatpush2.msra.mxu0 0.0
    %82 = vmatprep.subr.mxu0 0.0
    %83 = vmatpush2.msra.mxu0 0.0
    %84 = vmatprep.subr.mxu0 0.0
    %85 = vmatpush2.msra.mxu0 0.0
    %86 = vmatprep.subr.mxu0 0.0
    %87 = vmatpush2.msra.mxu0 0.0
    %88 = vmatprep.subr.mxu0 0.0
    %89 = vmatpush2.msra.mxu0 0.0
    %90 = vmatprep.subr.mxu0 0.0
    %91 = vmatpush2.msra.mxu0 0.0
    %92 = vmatprep.subr.mxu0 0.0
    %93 = vmatpush2.msra.mxu0 0.0
    %94 = vmatprep.subr.mxu0 0.0
    %95 = vmatpush2.msra.mxu0 0.0
    %96 = vmatprep.subr.mxu0 0.0
    %97 = vmatpush2.msra.mxu0 0.0
    %98 = vmatprep.subr.mxu0 0.0
    %99 = vmatpush2.msra.mxu0 0.0
    %100 = vmatprep.subr.mxu0 0.0
    %101 = vmatpush2.msra.mxu0 0.0
    %102 = vmatprep.subr.mxu0 0.0
    %103 = vmatpush2.msra.mxu0 0.0
    %104 = vmatprep.mubr.f32.mxu0 0.0
    %105 = vmatmul.mubr.f32.gmra.mxu0 %v35
    %v106 = vpop.f32.mrf.mxu0
    %v107 = vadd.f32 0.0, %v106
    %v108 = vpop.f32.mrf.mxu0
    %109 = vmatprep.mubr.f32.mxu0 0.0
    %110 = vmatmul.mubr.f32.gmra.mxu0 %v38
    %v111 = vpop.f32.mrf.mxu0
    %v112 = vadd.f32 0.0, %v111
    %v113 = vpop.f32.mrf.mxu0
    %114 = vdwg.mxu0
    %v115 = vadd.f32 %v25, %v107
    %v116 = vadd.f32 %v26, %v112
    %117 = vst.msk [vmem:[#allocation2] sm:$0xff] %vm33, %v115
    %118 = vst.msk [vmem:[#allocation2 + $0x8] sm:$0xff] %vm33, %v116
    // Predicated region
    $region22: #{transformer_prenorm_attention_block.7} parent=1 // pred_check
      %p119 = pneg %p18
    $region23: #{transformer_prenorm_attention_block.7} parent=1 // pred_check_branch
      %121 = sbr.rel (%p119) target = $region25
    $region24: #{transformer_prenorm_attention_block.7} parent=1 // pred_region
      %v122 = vld [vmem:[#allocation2] sm:$0xff]
      %v123 = vld [vmem:[#allocation2 + $0x8] sm:$0xff]
      %v124 = vld [vmem:[%s2] sm:$0x1]
      %v126 = vlaneseq
      %v127 = vshrl.u32 %v126, 7
      %v128 = vsub.s32 0, %v127
      %v129 = vrot.slane %v124, %v128
      %v131 = vadd.f32 %v122, %v129
      %v132 = vadd.f32 %v123, %v129
      %v133 = vld [vmem:[%s3] sm:$0xff]
      %v134 = vld [vmem:[%s3 + $0x8] sm:$0xff]
      %v135 = vadd.f32 %v131, %v133
      %v136 = vadd.f32 %v132, %v134
      %137 = vst.msk [vmem:[#allocation3] sm:$0xff] %vm33, %v135
      %138 = vst.msk [vmem:[#allocation3 + $0x8] sm:$0xff] %vm33, %v136
    $region25: #{transformer_prenorm_attention_block.7} parent=1 // pred_fallthru
      _
    // Predicated region
    $region26: #{transformer_prenorm_attention_block.7} parent=1 // pred_check
      _
    $region27: #{transformer_prenorm_attention_block.7} parent=1 // pred_check_branch
      %140 = sbr.rel (0) target = $region29
    $region28: #{transformer_prenorm_attention_block.7} parent=1 // pred_region
      %s142 = ssub.s32 256, 256
      %143 = vsyncadd [#allocation4], %s142
      %s144 = sshll.u32 [#allocation3], 4
      %s145 = int_to_ptr.vmem [resolvable:$true] %s144
      %150 = dma.vmem_to_hbm [thread:$0]  %s145, 256, %s4, [#allocation4], 128, 128, 8
    $region29: #{transformer_prenorm_attention_block.7} parent=1 // pred_fallthru
      _
    // Predicated region
    $region30: #{transformer_prenorm_attention_block.7} parent=1 // pred_check
      _
    $region31: #{transformer_prenorm_attention_block.7} parent=1 // pred_check_branch
      %152 = sbr.rel (0) target = $region33
    $region32: #{transformer_prenorm_attention_block.7} parent=1 // pred_region
      %153 = dma.done [#allocation4], 256
    $region33: #{transformer_prenorm_attention_block.7} parent=1 // pred_fallthru
      _
    %154 = vsyncpa [#allocation4], 1

// kernel: transformer_prenorm_attention_block.6
$region0: #{transformer_prenorm_attention_block.6}
  #allocation0 [shape = 'u32[]', space=smem, size = 0x4, offset = 0x4, fixed_abs, tag = 'smem constant byte address 0x4 - core index']
  #allocation1 [shape = 'u32[144,128]{1,0:T(1,128)}', space=vmem, size = 0x12000, scoped, tag = 'internal scratch']
  #allocation2 [shape = 'f32[8,4]{1,0:T(8,128)}', space=vmem, size = 0x1000, scoped, tag = 'scratch operand']
  #allocation3 [shape = 'f32[8,4]{1,0:T(8,128)}', space=vmem, size = 0x1000, scoped, tag = 'scratch operand']
  #allocation4 [shape = 'f32[8,32]{1,0:T(8,128)}', space=vmem, size = 0x1000, scoped, tag = 'scratch operand']
  %s0 = inlined_call_operand.vmem [shape: f32[3,2,8,32], index: 0, kind: input, shape index: {}, may-alias: {0,1,2}]
  %s1 = inlined_call_operand.vmem [shape: f32[3,2,8,32], index: 1, kind: input, shape index: {}, may-alias: {0,1,2}]
  %s2 = inlined_call_operand.vmem [shape: f32[3,2,8,32], index: 2, kind: input, shape index: {}, may-alias: {0,1,2}]
  %s3 = inlined_call_operand.vmem [shape: f32[2,8,8], index: 3, kind: input, shape index: {}]
  %s4 = inlined_call_operand.vmem [shape: f32[2,8,32], index: 4, kind: output, shape index: {}]
  %s5 = sld [smem:[#allocation0]]
  $region57: #{transformer_prenorm_attention_block.6} parent=0
    _
  %s7 = ssub.s32 1, %s5
  %s8 = scalar_select 0, %s7, %s5
  loop: start=0, step=1, limit=4
  $region2: #{transformer_prenorm_attention_block.6} parent=0 // loop_pre_header
    _
  $region3: #{transformer_prenorm_attention_block.6} parent=0 // loop_header
    %s10 = sphi 0, %s14
    %p11 = scmp.ge.s32.totalorder %s10, 4
    %s17 = sphi 0, %s36
    %s18 = sphi 0, %s32
    %s19 = sphi 0, %s28
    %s20 = sphi 0, %s17
    %s21 = sphi 0, %s18
    %s22 = sphi 0, %s19
    %s23 = sphi 0, %s20
    %s24 = sphi 0, %s21
    %s25 = sphi 0, %s22
    %s41 = sphi 0, %s43
    %s44 = sphi 0, %s41
    %s45 = sphi 0, %s44
    %s61 = sphi 0, %s45
    %s69 = sphi 0, %s71
    %s72 = sphi 0, %s69
    %s73 = sphi 0, %s72
    %s89 = sphi 0, %s73
    %s97 = sphi 0, %s99
    %s100 = sphi 0, %s97
    %s101 = sphi 0, %s100
    %s117 = sphi 0, %s101
    %s127 = sphi 0, %s129
    %s130 = sphi 0, %s127
    %s131 = sphi 0, %s130
    %s147 = sphi 0, %s131
    %s155 = sphi 0, %s157
    %s158 = sphi 0, %s155
    %s159 = sphi 0, %s158
    %s175 = sphi 0, %s159
  $region4: #{transformer_prenorm_attention_block.6} parent=0 // loop_header_branch
    %13 = sbr.rel (%p11) target = $region8
  $region5: #{transformer_prenorm_attention_block.6} parent=0 // loop_body
    %s15 = ssub.s32 %s10, 1
    %s16 = ssub.s32 %s10, 2
    %s26 = sadd.s32 1, %s19
    %p27 = scmp.ge.s32.totalorder %s26, 1
    %s28 = scalar_select %p27, 0, %s26
    %s29 = sadd.s32 1, %s18
    %s30 = scalar_select %p27, %s29, %s18
    %p31 = scmp.ge.s32.totalorder %s30, 1
    %s32 = scalar_select %p31, 0, %s30
    %s33 = sadd.s32 1, %s17
    %s34 = scalar_select %p31, %s33, %s17
    %p35 = scmp.ge.s32.totalorder %s34, 2
    %s36 = scalar_select %p35, 0, %s34
    %s37 = ssub.s32 %s17, %s36
    %s38 = ssub.s32 %s18, %s32
    %s39 = sor.u32 %s37, %s38
    %p40 = scmp.eq.s32.totalorder %s39, 0
    %s42 = sadd.s32 %s41, 1
    %s43 = scalar_select %p40, %s41, %s42
    %p46 = pneg %p40
    %p47 = scmp.eq.s32.totalorder %s10, 1
    %p48 = por %p46, %p47
    %p49 = scmp.ne.s32.totalorder %s41, %s44
    %p50 = scmp.eq.s32.totalorder %s10, 0
    %p51 = por %p49, %p50
    %p52 = scmp.ne.s32.totalorder %s41, %s44
    %p53 = scmp.eq.s32.totalorder %s15, 1
    %p54 = por %p52, %p53
    %p55 = scmp.ne.s32.totalorder %s44, %s45
    %p56 = scmp.eq.s32.totalorder %s15, 0
    %p57 = por %p55, %p56
    %p58 = scmp.ne.s32.totalorder %s44, %s45
    %p59 = scmp.eq.s32.totalorder %s16, 1
    %p60 = por %p58, %p59
    %p62 = scmp.ne.s32.totalorder %s45, %s61
    %p63 = scmp.eq.s32.totalorder %s16, 0
    %p64 = por %p62, %p63
    %s65 = ssub.s32 %s17, %s36
    %s66 = ssub.s32 %s19, %s28
    %s67 = sor.u32 %s65, %s66
    %p68 = scmp.eq.s32.totalorder %s67, 0
    %s70 = sadd.s32 %s69, 1
    %s71 = scalar_select %p68, %s69, %s70
    %p74 = pneg %p68
    %p75 = scmp.eq.s32.totalorder %s10, 1
    %p76 = por %p74, %p75
    %p77 = scmp.ne.s32.totalorder %s69, %s72
    %p78 = scmp.eq.s32.totalorder %s10, 0
    %p79 = por %p77, %p78
    %p80 = scmp.ne.s32.totalorder %s69, %s72
    %p81 = scmp.eq.s32.totalorder %s15, 1
    %p82 = por %p80, %p81
    %p83 = scmp.ne.s32.totalorder %s72, %s73
    %p84 = scmp.eq.s32.totalorder %s15, 0
    %p85 = por %p83, %p84
    %p86 = scmp.ne.s32.totalorder %s72, %s73
    %p87 = scmp.eq.s32.totalorder %s16, 1
    %p88 = por %p86, %p87
    %p90 = scmp.ne.s32.totalorder %s73, %s89
    %p91 = scmp.eq.s32.totalorder %s16, 0
    %p92 = por %p90, %p91
    %s93 = ssub.s32 %s17, %s36
    %s94 = ssub.s32 %s19, %s28
    %s95 = sor.u32 %s93, %s94
    %p96 = scmp.eq.s32.totalorder %s95, 0
    %s98 = sadd.s32 %s97, 1
    %s99 = scalar_select %p96, %s97, %s98
    %p102 = pneg %p96
    %p103 = scmp.eq.s32.totalorder %s10, 1
    %p104 = por %p102, %p103
    %p105 = scmp.ne.s32.totalorder %s97, %s100
    %p106 = scmp.eq.s32.totalorder %s10, 0
    %p107 = por %p105, %p106
    %p108 = scmp.ne.s32.totalorder %s97, %s100
    %p109 = scmp.eq.s32.totalorder %s15, 1
    %p110 = por %p108, %p109
    %p111 = scmp.ne.s32.totalorder %s100, %s101
    %p112 = scmp.eq.s32.totalorder %s15, 0
    %p113 = por %p111, %p112
    %p114 = scmp.ne.s32.totalorder %s100, %s101
    %p115 = scmp.eq.s32.totalorder %s16, 1
    %p116 = por %p114, %p115
    %p118 = scmp.ne.s32.totalorder %s101, %s117
    %p119 = scmp.eq.s32.totalorder %s16, 0
    %p120 = por %p118, %p119
    %s121 = ssub.s32 %s17, %s36
    %s122 = ssub.s32 %s18, %s32
    %s123 = sor.u32 %s121, %s122
    %s124 = ssub.s32 %s19, %s28
    %s125 = sor.u32 %s123, %s124
    %p126 = scmp.eq.s32.totalorder %s125, 0
    %s128 = sadd.s32 %s127, 1
    %s129 = scalar_select %p126, %s127, %s128
    %p132 = pneg %p126
    %p133 = scmp.eq.s32.totalorder %s10, 1
    %p134 = por %p132, %p133
    %p135 = scmp.ne.s32.totalorder %s127, %s130
    %p136 = scmp.eq.s32.totalorder %s10, 0
    %p137 = por %p135, %p136
    %p138 = scmp.ne.s32.totalorder %s127, %s130
    %p139 = scmp.eq.s32.totalorder %s15, 1
    %p140 = por %p138, %p139
    %p141 = scmp.ne.s32.totalorder %s130, %s131
    %p142 = scmp.eq.s32.totalorder %s15, 0
    %p143 = por %p141, %p142
    %p144 = scmp.ne.s32.totalorder %s130, %s131
    %p145 = scmp.eq.s32.totalorder %s16, 1
    %p146 = por %p144, %p145
    %p148 = scmp.ne.s32.totalorder %s131, %s147
    %p149 = scmp.eq.s32.totalorder %s16, 0
    %p150 = por %p148, %p149
    %s151 = ssub.s32 %s17, %s36
    %s152 = ssub.s32 %s18, %s32
    %s153 = sor.u32 %s151, %s152
    %p154 = scmp.eq.s32.totalorder %s153, 0
    %s156 = sadd.s32 %s155, 1
    %s157 = scalar_select %p154, %s155, %s156
    %p160 = pneg %p154
    %p161 = scmp.eq.s32.totalorder %s10, 1
    %p162 = por %p160, %p161
    %p163 = scmp.ne.s32.totalorder %s155, %s158
    %p164 = scmp.eq.s32.totalorder %s10, 0
    %p165 = por %p163, %p164
    %p166 = scmp.ne.s32.totalorder %s155, %s158
    %p167 = scmp.eq.s32.totalorder %s15, 1
    %p168 = por %p166, %p167
    %p169 = scmp.ne.s32.totalorder %s158, %s159
    %p170 = scmp.eq.s32.totalorder %s15, 0
    %p171 = por %p169, %p170
    %p172 = scmp.ne.s32.totalorder %s158, %s159
    %p173 = scmp.eq.s32.totalorder %s16, 1
    %p174 = por %p172, %p173
    %p176 = scmp.ne.s32.totalorder %s159, %s175
    %p177 = scmp.eq.s32.totalorder %s16, 0
    %p178 = por %p176, %p177
    %p179 = scmp.le.s32.totalorder 1, %s10
    %p180 = scmp.lt.s32.totalorder %s10, 3
    %p181 = pnand %p179, %p180
    %p182 = pneg %p181
    // Predicated region
    $region9: #{transformer_prenorm_attention_block.6} parent=5 // pred_check
      _
    $region10: #{transformer_prenorm_attention_block.6} parent=5 // pred_check_branch
      %184 = sbr.rel (%p181) target = $region12
    $region11: #{transformer_prenorm_attention_block.6} parent=5 // pred_region
      %s185 = ssub.s32 %s10, 1
    $region12: #{transformer_prenorm_attention_block.6} parent=5 // pred_fallthru
      _
    %p186 = scmp.lt.s32.totalorder %s10, 2
    // Predicated region
    $region13: #{transformer_prenorm_attention_block.6} parent=5 // pred_check
      %p187 = pneg %p186
    $region14: #{transformer_prenorm_attention_block.6} parent=5 // pred_check_branch
      %189 = sbr.rel (%p187) target = $region16
    $region15: #{transformer_prenorm_attention_block.6} parent=5 // pred_region
      // Predicated region
      $region17: #{transformer_prenorm_attention_block.6} parent=15 // pred_check
        %p190 = pneg %p51
      $region18: #{transformer_prenorm_attention_block.6} parent=15 // pred_check_branch
        %192 = sbr.rel (%p190) target = $region20
      $region19: #{transformer_prenorm_attention_block.6} parent=15 // pred_region
        %p193 = scmp.lt.s32.totalorder %s17, 1
        %s194 = scalar_select %p193, %s17, 1
        %p195 = scmp.lt.s32.totalorder %s18, 0
        %s196 = scalar_select %p195, %s18, 0
        %s197 = sadd.s32 %s196, %s194
        %s198 = smul.addr %s197, 8
        %s199 = scalar_lea.vmem %s0, %s198
      $region20: #{transformer_prenorm_attention_block.6} parent=15 // pred_fallthru
        _
      // Predicated region
      $region21: #{transformer_prenorm_attention_block.6} parent=15 // pred_check
        %p200 = pneg %p79
      $region22: #{transformer_prenorm_attention_block.6} parent=15 // pred_check_branch
        %202 = sbr.rel (%p200) target = $region24
      $region23: #{transformer_prenorm_attention_block.6} parent=15 // pred_region
        %p203 = scmp.lt.s32.totalorder %s17, 1
        %s204 = scalar_select %p203, %s17, 1
        %p205 = scmp.lt.s32.totalorder %s19, 0
        %s206 = scalar_select %p205, %s19, 0
        %s207 = sadd.s32 %s206, %s204
        %s208 = sadd.s32 %s207, 2
        %s209 = smul.addr %s208, 8
        %s210 = scalar_lea.vmem %s1, %s209
      $region24: #{transformer_prenorm_attention_block.6} parent=15 // pred_fallthru
        _
      // Predicated region
      $region25: #{transformer_prenorm_attention_block.6} parent=15 // pred_check
        %p211 = pneg %p107
      $region26: #{transformer_prenorm_attention_block.6} parent=15 // pred_check_branch
        %213 = sbr.rel (%p211) target = $region28
      $region27: #{transformer_prenorm_attention_block.6} parent=15 // pred_region
        %p214 = scmp.lt.s32.totalorder %s17, 1
        %s215 = scalar_select %p214, %s17, 1
        %p216 = scmp.lt.s32.totalorder %s19, 0
        %s217 = scalar_select %p216, %s19, 0
        %s218 = sadd.s32 %s217, %s215
        %s219 = sadd.s32 %s218, 4
        %s220 = smul.addr %s219, 8
        %s221 = scalar_lea.vmem %s2, %s220
      $region28: #{transformer_prenorm_attention_block.6} parent=15 // pred_fallthru
        _
      // Predicated region
      $region29: #{transformer_prenorm_attention_block.6} parent=15 // pred_check
        %p222 = pneg %p137
      $region30: #{transformer_prenorm_attention_block.6} parent=15 // pred_check_branch
        %224 = sbr.rel (%p222) target = $region32
      $region31: #{transformer_prenorm_attention_block.6} parent=15 // pred_region
        %p225 = scmp.lt.s32.totalorder %s17, 1
        %s226 = scalar_select %p225, %s17, 1
        %p227 = scmp.lt.s32.totalorder %s18, 0
        %s228 = scalar_select %p227, %s18, 0
        %p229 = scmp.lt.s32.totalorder %s19, 0
        %s230 = scalar_select %p229, %s19, 0
        %s231 = sadd.s32 %s230, %s228
        %s232 = sadd.s32 %s231, %s226
        %s233 = smul.addr %s232, 8
        %s234 = scalar_lea.vmem %s3, %s233
      $region32: #{transformer_prenorm_attention_block.6} parent=15 // pred_fallthru
        _
    $region16: #{transformer_prenorm_attention_block.6} parent=5 // pred_fallthru
      _
    %p235 = scmp.le.s32.totalorder 1, %s10
    %p236 = scmp.lt.s32.totalorder %s10, 3
    %p237 = pnand %p235, %p236
    %p238 = pneg %p237
    // Predicated region
    $region33: #{transformer_prenorm_attention_block.6} parent=5 // pred_check
      _
    $region34: #{transformer_prenorm_attention_block.6} parent=5 // pred_check_branch
      %240 = sbr.rel (%p237) target = $region36
    $region35: #{transformer_prenorm_attention_block.6} parent=5 // pred_region
      %s241 = ssub.s32 %s10, 1
      %p242 = scmp.lt.s32.totalorder %s20, 1
      %s243 = scalar_select %p242, %s20, 1
      %p244 = scmp.lt.s32.totalorder %s21, 0
      %s245 = scalar_select %p244, %s21, 0
      %s246 = sadd.s32 %s245, %s243
      %s247 = smul.addr %s246, 8
      %s248 = scalar_lea.vmem %s0, %s247
      %p249 = pneg %p57
      %p250 = pneg %p54
      %p251 = scmp.lt.s32.totalorder %s20, 1
      %s252 = scalar_select %p251, %s20, 1
      %p253 = scmp.lt.s32.totalorder %s22, 0
      %s254 = scalar_select %p253, %s22, 0
      %s255 = sadd.s32 %s254, %s252
      %s256 = sadd.s32 %s255, 2
      %s257 = smul.addr %s256, 8
      %s258 = scalar_lea.vmem %s1, %s257
      %p259 = pneg %p85
      %p260 = pneg %p82
      %p261 = scmp.lt.s32.totalorder %s20, 1
      %s262 = scalar_select %p261, %s20, 1
      %p263 = scmp.lt.s32.totalorder %s22, 0
      %s264 = scalar_select %p263, %s22, 0
      %s265 = sadd.s32 %s264, %s262
      %s266 = sadd.s32 %s265, 4
      %s267 = smul.addr %s266, 8
      %s268 = scalar_lea.vmem %s2, %s267
      %p269 = pneg %p113
      %p270 = pneg %p110
      %p271 = scmp.lt.s32.totalorder %s20, 1
      %s272 = scalar_select %p271, %s20, 1
      %p273 = scmp.lt.s32.totalorder %s21, 0
      %s274 = scalar_select %p273, %s21, 0
      %p275 = scmp.lt.s32.totalorder %s22, 0
      %s276 = scalar_select %p275, %s22, 0
      %s277 = sadd.s32 %s276, %s274
      %s278 = sadd.s32 %s277, %s272
      %s279 = smul.addr %s278, 8
      %s280 = scalar_lea.vmem %s3, %s279
      %p281 = pneg %p143
      %p282 = pneg %p140
      %p283 = pneg %p171
      %p284 = pneg %p168
      %p285 = scmp.lt.s32.totalorder %s20, 1
      %s286 = scalar_select %p285, %s20, 1
      %p287 = scmp.lt.s32.totalorder %s21, 0
      %s288 = scalar_select %p287, %s21, 0
      %s289 = sadd.s32 %s288, %s286
      %s290 = smul.addr %s289, 8
      %s291 = scalar_lea.vmem %s4, %s290
      %p292 = scmp.lt.s32.totalorder %s20, 1
      %s293 = scalar_select %p292, %s20, 1
      %p294 = scmp.lt.s32.totalorder %s21, 0
      %s295 = scalar_select %p294, %s21, 0
      %s296 = sadd.s32 %s295, %s293
      %s297 = smul.addr %s296, 8
      %s298 = scalar_lea.vmem %s0, %s297
      %p299 = scmp.lt.s32.totalorder %s20, 1
      %s300 = scalar_select %p299, %s20, 1
      %p301 = scmp.lt.s32.totalorder %s22, 0
      %s302 = scalar_select %p301, %s22, 0
      %s303 = sadd.s32 %s302, %s300
      %s304 = sadd.s32 %s303, 2
      %s305 = smul.addr %s304, 8
      %s306 = scalar_lea.vmem %s1, %s305
      %p307 = scmp.lt.s32.totalorder %s20, 1
      %s308 = scalar_select %p307, %s20, 1
      %p309 = scmp.lt.s32.totalorder %s22, 0
      %s310 = scalar_select %p309, %s22, 0
      %s311 = sadd.s32 %s310, %s308
      %s312 = sadd.s32 %s311, 4
      %s313 = smul.addr %s312, 8
      %s314 = scalar_lea.vmem %s2, %s313
      %p315 = scmp.lt.s32.totalorder %s20, 1
      %s316 = scalar_select %p315, %s20, 1
      %p317 = scmp.lt.s32.totalorder %s21, 0
      %s318 = scalar_select %p317, %s21, 0
      %p319 = scmp.lt.s32.totalorder %s22, 0
      %s320 = scalar_select %p319, %s22, 0
      %s321 = sadd.s32 %s320, %s318
      %s322 = sadd.s32 %s321, %s316
      %s323 = smul.addr %s322, 8
      %s324 = scalar_lea.vmem %s3, %s323
      %p325 = scmp.lt.s32.totalorder %s20, 1
      %s326 = scalar_select %p325, %s20, 1
      %p327 = scmp.lt.s32.totalorder %s21, 0
      %s328 = scalar_select %p327, %s21, 0
      %s329 = sadd.s32 %s328, %s326
      %s330 = smul.addr %s329, 8
      %s331 = scalar_lea.vmem %s4, %s330
      %p332 = scmp.eq.s32.totalorder %s22, 0
      // Predicated region
      $region37: #{transformer_prenorm_attention_block.6} parent=35 // pred_check
        %p333 = pneg %p332
      $region38: #{transformer_prenorm_attention_block.6} parent=35 // pred_check_branch
        %335 = sbr.rel (%p333) target = $region40
      $region39: #{transformer_prenorm_attention_block.6} parent=35 // pred_region
        %vm336 = vcmask 31744
        %337 = vst.msk [vmem:[#allocation2] sm:$0xff] %vm336, -inf
        %338 = vst.msk [vmem:[#allocation3] sm:$0xff] %vm336, 0.0
        %vm339 = vcmask 261120
        %340 = vst.msk [vmem:[#allocation4] sm:$0xff] %vm339, 0.0
      $region40: #{transformer_prenorm_attention_block.6} parent=35 // pred_fallthru
        _
      %v341 = vld [vmem:[%s324] sm:$0xff]
      %v342 = vld [vmem:[%s298] sm:$0xff]
      %v343 = vmul.f32 %v342, 0.35355338
      %v344 = vld [vmem:[%s306] sm:$0xff]
      %v345 = vld [vmem:[%s314] sm:$0xff]
      %vm346 = vcmask 64512
      %v348 = vsel %vm346, %v343, 0
      %v351 = vsel %vm346, %v344, 0
      %353 = vmatprep.subr.mxu0 0.0
      %354 = vmatpush1.xpose.msra.mxu0 0.0
      %355 = vmatprep.subr.mxu0 0.0
      %356 = vmatpush1.xpose.msra.mxu0 0.0
      %357 = vmatprep.subr.mxu0 0.0
      %358 = vmatpush1.xpose.msra.mxu0 0.0
      %359 = vmatprep.subr.mxu0 0.0
      %360 = vmatpush1.xpose.msra.mxu0 0.0
      %361 = vmatprep.subr.mxu0 0.0
      %362 = vmatpush1.xpose.msra.mxu0 0.0
      %363 = vmatprep.subr.mxu0 0.0
      %364 = vmatpush1.xpose.msra.mxu0 0.0
      %365 = vmatprep.subr.mxu0 0.0
      %366 = vmatpush1.xpose.msra.mxu0 0.0
      %367 = vmatprep.subr.mxu0 0.0
      %368 = vmatpush1.xpose.msra.mxu0 0.0
      %369 = vmatprep.subr.mxu0 0.0
      %370 = vmatpush1.xpose.msra.mxu0 0.0
      %371 = vmatprep.subr.mxu0 0.0
      %372 = vmatpush1.xpose.msra.mxu0 0.0
      %373 = vmatprep.subr.mxu0 0.0
      %374 = vmatpush1.xpose.msra.mxu0 0.0
      %375 = vmatprep.subr.mxu0 0.0
      %376 = vmatpush1.xpose.msra.mxu0 0.0
      %377 = vmatprep.subr.mxu0 0.0
      %378 = vmatpush1.xpose.msra.mxu0 0.0
      %379 = vmatprep.subr.mxu0 0.0
      %380 = vmatpush1.xpose.msra.mxu0 0.0
      %381 = vmatprep.subr.mxu0 0.0
      %382 = vmatpush1.xpose.msra.mxu0 0.0
      %383 = vmatprep.subr.mxu0 0.0
      %384 = vmatpush1.xpose.msra.mxu0 %v351
      %385 = vmatprep.subr.mxu0 0.0
      %386 = vmatpush2.xpose.msra.mxu0 0.0
      %387 = vmatprep.subr.mxu0 0.0
      %388 = vmatpush2.xpose.msra.mxu0 0.0
      %389 = vmatprep.subr.mxu0 0.0
      %390 = vmatpush2.xpose.msra.mxu0 0.0
      %391 = vmatprep.subr.mxu0 0.0
      %392 = vmatpush2.xpose.msra.mxu0 0.0
      %393 = vmatprep.subr.mxu0 0.0
      %394 = vmatpush2.xpose.msra.mxu0 0.0
      %395 = vmatprep.subr.mxu0 0.0
      %396 = vmatpush2.xpose.msra.mxu0 0.0
      %397 = vmatprep.subr.mxu0 0.0
      %398 = vmatpush2.xpose.msra.mxu0 0.0
      %399 = vmatprep.subr.mxu0 0.0
      %400 = vmatpush2.xpose.msra.mxu0 0.0
      %401 = vmatprep.subr.mxu0 0.0
      %402 = vmatpush2.xpose.msra.mxu0 0.0
      %403 = vmatprep.subr.mxu0 0.0
      %404 = vmatpush2.xpose.msra.mxu0 0.0
      %405 = vmatprep.subr.mxu0 0.0
      %406 = vmatpush2.xpose.msra.mxu0 0.0
      %407 = vmatprep.subr.mxu0 0.0
      %408 = vmatpush2.xpose.msra.mxu0 0.0
      %409 = vmatprep.subr.mxu0 0.0
      %410 = vmatpush2.xpose.msra.mxu0 0.0
      %411 = vmatprep.subr.mxu0 0.0
      %412 = vmatpush2.xpose.msra.mxu0 0.0
      %413 = vmatprep.subr.mxu0 0.0
      %414 = vmatpush2.xpose.msra.mxu0 0.0
      %415 = vmatprep.subr.mxu0 0.0
      %416 = vmatpush2.xpose.msra.mxu0 0.0
      %417 = vmatprep.mubr.f32.mxu0 0.0
      %418 = vmatmul.mubr.f32.gmra.mxu0 %v348
      %v419 = vpop.f32.mrf.mxu0
      %v420 = vadd.f32 %v341, %v419
      %v421 = vpop.f32.mrf.mxu0
      %422 = vdwg.mxu0
      %v423 = vld [vmem:[#allocation2] sm:$0xff]
      %v424 = vld [vmem:[#allocation3] sm:$0xff]
      %v425 = vsel %vm346, %v420, -inf
      %426 = vmax.xlane.f32.xlu0 %v425
      %v427 = vpop.xlane.xlu0 %426
      %v428 = vmax.f32 %v423, %v427
      %v429 = vsub.f32 %v423, %v428
      %v430 = vmul.f32 %v429, 1.442695
      %v431 = vpow.pop %v430
      %433 = vset.pattern.permute.xlu0 0
      %434 = vperm.xlu0 %433, %v428
      %v435 = vpop.permute.xlu0 %434
      %v437 = vsub.f32 %v420, %v435
      %v438 = vmul.f32 %v437, 1.442695
      %v439 = vpow.pop %v438
      %v440 = vmul.f32 %v431, %v424
      %v441 = vsel %vm346, %v439, 0.0
      %442 = vadd.xlane.f32.xlu0 %v441
      %v443 = vpop.xlane.xlu0 %442
      %v444 = vadd.f32 %v440, %v443
      %vm445 = vcmask 7168
      %446 = vst.msk [vmem:[#allocation3] sm:$0xff] %vm445, %v444
      %447 = vst.msk [vmem:[#allocation2] sm:$0xff] %vm445, %v428
      %v449 = vsel %vm346, %v439, 0
      %451 = vmatprep.subr.mxu0 0.0
      %452 = vmatpush1.msra.mxu0 0.0
      %453 = vmatprep.subr.mxu0 0.0
      %454 = vmatpush1.msra.mxu0 0.0
      %455 = vmatprep.subr.mxu0 0.0
      %456 = vmatpush1.msra.mxu0 0.0
      %457 = vmatprep.subr.mxu0 0.0
      %458 = vmatpush1.msra.mxu0 0.0
      %459 = vmatprep.subr.mxu0 0.0
      %460 = vmatpush1.msra.mxu0 0.0
      %461 = vmatprep.subr.mxu0 0.0
      %462 = vmatpush1.msra.mxu0 0.0
      %463 = vmatprep.subr.mxu0 0.0
      %464 = vmatpush1.msra.mxu0 0.0
      %465 = vmatprep.subr.mxu0 0.0
      %466 = vmatpush1.msra.mxu0 0.0
      %467 = vmatprep.subr.mxu0 0.0
      %468 = vmatpush1.msra.mxu0 0.0
      %469 = vmatprep.subr.mxu0 0.0
      %470 = vmatpush1.msra.mxu0 0.0
      %471 = vmatprep.subr.mxu0 0.0
      %472 = vmatpush1.msra.mxu0 0.0
      %473 = vmatprep.subr.mxu0 0.0
      %474 = vmatpush1.msra.mxu0 0.0
      %475 = vmatprep.subr.mxu0 0.0
      %476 = vmatpush1.msra.mxu0 0.0
      %477 = vmatprep.subr.mxu0 0.0
      %478 = vmatpush1.msra.mxu0 0.0
      %479 = vmatprep.subr.mxu0 0.0
      %480 = vmatpush1.msra.mxu0 0.0
      %481 = vmatprep.subr.mxu0 0.0
      %482 = vmatpush1.msra.mxu0 %v345
      %483 = vmatprep.subr.mxu0 0.0
      %484 = vmatpush2.msra.mxu0 0.0
      %485 = vmatprep.subr.mxu0 0.0
      %486 = vmatpush2.msra.mxu0 0.0
      %487 = vmatprep.subr.mxu0 0.0
      %488 = vmatpush2.msra.mxu0 0.0
      %489 = vmatprep.subr.mxu0 0.0
      %490 = vmatpush2.msra.mxu0 0.0
      %491 = vmatprep.subr.mxu0 0.0
      %492 = vmatpush2.msra.mxu0 0.0
      %493 = vmatprep.subr.mxu0 0.0
      %494 = vmatpush2.msra.mxu0 0.0
      %495 = vmatprep.subr.mxu0 0.0
      %496 = vmatpush2.msra.mxu0 0.0
      %497 = vmatprep.subr.mxu0 0.0
      %498 = vmatpush2.msra.mxu0 0.0
      %499 = vmatprep.subr.mxu0 0.0
      %500 = vmatpush2.msra.mxu0 0.0
      %501 = vmatprep.subr.mxu0 0.0
      %502 = vmatpush2.msra.mxu0 0.0
      %503 = vmatprep.subr.mxu0 0.0
      %504 = vmatpush2.msra.mxu0 0.0
      %505 = vmatprep.subr.mxu0 0.0
      %506 = vmatpush2.msra.mxu0 0.0
      %507 = vmatprep.subr.mxu0 0.0
      %508 = vmatpush2.msra.mxu0 0.0
      %509 = vmatprep.subr.mxu0 0.0
      %510 = vmatpush2.msra.mxu0 0.0
      %511 = vmatprep.subr.mxu0 0.0
      %512 = vmatpush2.msra.mxu0 0.0
      %513 = vmatprep.subr.mxu0 0.0
      %514 = vmatpush2.msra.mxu0 0.0
      %515 = vmatprep.mubr.f32.mxu0 0.0
      %516 = vmatmul.mubr.f32.gmra.mxu0 %v449
      %v517 = vpop.f32.mrf.mxu0
      %v518 = vadd.f32 0.0, %v517
      %v519 = vpop.f32.mrf.mxu0
      %520 = vdwg.mxu0
      %v521 = vld [vmem:[#allocation4] sm:$0xff]
      %523 = vset.pattern.permute.xlu0 0
      %524 = vperm.xlu0 %523, %v431
      %v525 = vpop.permute.xlu0 %524
      %v527 = vmul.f32 %v525, %v521
      %v528 = vadd.f32 %v527, %v518
      %529 = vst.msk [vmem:[#allocation4] sm:$0xff] %vm346, %v528
      %530 = vrot.lane.b32.xlu0 %v343, 120
      %v531 = vpop.permute.xlu0 %530
      %532 = vrot.lane.b32.xlu0 %v344, 120
      %v533 = vpop.permute.xlu0 %532
      %v534 = vsel %vm346, %v531, 0
      %v536 = vsel %vm346, %v533, 0
      %538 = vmatprep.subr.mxu0 0.0
      %539 = vmatpush1.xpose.msra.mxu0 0.0
      %540 = vmatprep.subr.mxu0 0.0
      %541 = vmatpush1.xpose.msra.mxu0 0.0
      %542 = vmatprep.subr.mxu0 0.0
      %543 = vmatpush1.xpose.msra.mxu0 0.0
      %544 = vmatprep.subr.mxu0 0.0
      %545 = vmatpush1.xpose.msra.mxu0 0.0
      %546 = vmatprep.subr.mxu0 0.0
      %547 = vmatpush1.xpose.msra.mxu0 0.0
      %548 = vmatprep.subr.mxu0 0.0
      %549 = vmatpush1.xpose.msra.mxu0 0.0
      %550 = vmatprep.subr.mxu0 0.0
      %551 = vmatpush1.xpose.msra.mxu0 0.0
      %552 = vmatprep.subr.mxu0 0.0
      %553 = vmatpush1.xpose.msra.mxu0 0.0
      %554 = vmatprep.subr.mxu0 0.0
      %555 = vmatpush1.xpose.msra.mxu0 0.0
      %556 = vmatprep.subr.mxu0 0.0
      %557 = vmatpush1.xpose.msra.mxu0 0.0
      %558 = vmatprep.subr.mxu0 0.0
      %559 = vmatpush1.xpose.msra.mxu0 0.0
      %560 = vmatprep.subr.mxu0 0.0
      %561 = vmatpush1.xpose.msra.mxu0 0.0
      %562 = vmatprep.subr.mxu0 0.0
      %563 = vmatpush1.xpose.msra.mxu0 0.0
      %564 = vmatprep.subr.mxu0 0.0
      %565 = vmatpush1.xpose.msra.mxu0 0.0
      %566 = vmatprep.subr.mxu0 0.0
      %567 = vmatpush1.xpose.msra.mxu0 0.0
      %568 = vmatprep.subr.mxu0 0.0
      %569 = vmatpush1.xpose.msra.mxu0 %v536
      %570 = vmatprep.subr.mxu0 0.0
      %571 = vmatpush2.xpose.msra.mxu0 0.0
      %572 = vmatprep.subr.mxu0 0.0
      %573 = vmatpush2.xpose.msra.mxu0 0.0
      %574 = vmatprep.subr.mxu0 0.0
      %575 = vmatpush2.xpose.msra.mxu0 0.0
      %576 = vmatprep.subr.mxu0 0.0
      %577 = vmatpush2.xpose.msra.mxu0 0.0
      %578 = vmatprep.subr.mxu0 0.0
      %579 = vmatpush2.xpose.msra.mxu0 0.0
      %580 = vmatprep.subr.mxu0 0.0
      %581 = vmatpush2.xpose.msra.mxu0 0.0
      %582 = vmatprep.subr.mxu0 0.0
      %583 = vmatpush2.xpose.msra.mxu0 0.0
      %584 = vmatprep.subr.mxu0 0.0
      %585 = vmatpush2.xpose.msra.mxu0 0.0
      %586 = vmatprep.subr.mxu0 0.0
      %587 = vmatpush2.xpose.msra.mxu0 0.0
      %588 = vmatprep.subr.mxu0 0.0
      %589 = vmatpush2.xpose.msra.mxu0 0.0
      %590 = vmatprep.subr.mxu0 0.0
      %591 = vmatpush2.xpose.msra.mxu0 0.0
      %592 = vmatprep.subr.mxu0 0.0
      %593 = vmatpush2.xpose.msra.mxu0 0.0
      %594 = vmatprep.subr.mxu0 0.0
      %595 = vmatpush2.xpose.msra.mxu0 0.0
      %596 = vmatprep.subr.mxu0 0.0
      %597 = vmatpush2.xpose.msra.mxu0 0.0
      %598 = vmatprep.subr.mxu0 0.0
      %599 = vmatpush2.xpose.msra.mxu0 0.0
      %600 = vmatprep.subr.mxu0 0.0
      %601 = vmatpush2.xpose.msra.mxu0 0.0
      %602 = vmatprep.mubr.f32.mxu0 0.0
      %603 = vmatmul.mubr.f32.gmra.mxu0 %v534
      %v604 = vpop.f32.mrf.mxu0
      %v605 = vadd.f32 %v341, %v604
      %v606 = vpop.f32.mrf.mxu0
      %607 = vdwg.mxu0
      %v608 = vld [vmem:[#allocation2] sm:$0xff]
      %v609 = vld [vmem:[#allocation3] sm:$0xff]
      %v610 = vsel %vm346, %v605, -inf
      %611 = vmax.xlane.f32.xlu0 %v610
      %v612 = vpop.xlane.xlu0 %611
      %v613 = vmax.f32 %v608, %v612
      %v614 = vsub.f32 %v608, %v613
      %v615 = vmul.f32 %v614, 1.442695
      %v616 = vpow.pop %v615
      %618 = vset.pattern.permute.xlu0 1
      %619 = vperm.xlu0 %618, %v613
      %v620 = vpop.permute.xlu0 %619
      %v622 = vsub.f32 %v605, %v620
      %v623 = vmul.f32 %v622, 1.442695
      %v624 = vpow.pop %v623
      %v625 = vmul.f32 %v616, %v609
      %v626 = vsel %vm346, %v624, 0.0
      %627 = vadd.xlane.f32.xlu0 %v626
      %v628 = vpop.xlane.xlu0 %627
      %v629 = vadd.f32 %v625, %v628
      %vm630 = vcmask 15368
      %631 = vst.msk [vmem:[#allocation3] sm:$0xff] %vm630, %v629
      %632 = vst.msk [vmem:[#allocation2] sm:$0xff] %vm630, %v613
      %634 = vrot.lane.b32.xlu0 %v345, 120
      %v635 = vpop.permute.xlu0 %634
      %v638 = vsel %vm346, %v624, 0
      %640 = vmatprep.subr.mxu0 0.0
      %641 = vmatpush1.msra.mxu0 0.0
      %642 = vmatprep.subr.mxu0 0.0
      %643 = vmatpush1.msra.mxu0 0.0
      %644 = vmatprep.subr.mxu0 0.0
      %645 = vmatpush1.msra.mxu0 0.0
      %646 = vmatprep.subr.mxu0 0.0
      %647 = vmatpush1.msra.mxu0 0.0
      %648 = vmatprep.subr.mxu0 0.0
      %649 = vmatpush1.msra.mxu0 0.0
      %650 = vmatprep.subr.mxu0 0.0
      %651 = vmatpush1.msra.mxu0 0.0
      %652 = vmatprep.subr.mxu0 0.0
      %653 = vmatpush1.msra.mxu0 0.0
      %654 = vmatprep.subr.mxu0 0.0
      %655 = vmatpush1.msra.mxu0 0.0
      %656 = vmatprep.subr.mxu0 0.0
      %657 = vmatpush1.msra.mxu0 0.0
      %658 = vmatprep.subr.mxu0 0.0
      %659 = vmatpush1.msra.mxu0 0.0
      %660 = vmatprep.subr.mxu0 0.0
      %661 = vmatpush1.msra.mxu0 0.0
      %662 = vmatprep.subr.mxu0 0.0
      %663 = vmatpush1.msra.mxu0 0.0
      %664 = vmatprep.subr.mxu0 0.0
      %665 = vmatpush1.msra.mxu0 0.0
      %666 = vmatprep.subr.mxu0 0.0
      %667 = vmatpush1.msra.mxu0 0.0
      %668 = vmatprep.subr.mxu0 0.0
      %669 = vmatpush1.msra.mxu0 0.0
      %670 = vmatprep.subr.mxu0 0.0
      %671 = vmatpush1.msra.mxu0 %v635
      %672 = vmatprep.subr.mxu0 0.0
      %673 = vmatpush2.msra.mxu0 0.0
      %674 = vmatprep.subr.mxu0 0.0
      %675 = vmatpush2.msra.mxu0 0.0
      %676 = vmatprep.subr.mxu0 0.0
      %677 = vmatpush2.msra.mxu0 0.0
      %678 = vmatprep.subr.mxu0 0.0
      %679 = vmatpush2.msra.mxu0 0.0
      %680 = vmatprep.subr.mxu0 0.0
      %681 = vmatpush2.msra.mxu0 0.0
      %682 = vmatprep.subr.mxu0 0.0
      %683 = vmatpush2.msra.mxu0 0.0
      %684 = vmatprep.subr.mxu0 0.0
      %685 = vmatpush2.msra.mxu0 0.0
      %686 = vmatprep.subr.mxu0 0.0
      %687 = vmatpush2.msra.mxu0 0.0
      %688 = vmatprep.subr.mxu0 0.0
      %689 = vmatpush2.msra.mxu0 0.0
      %690 = vmatprep.subr.mxu0 0.0
      %691 = vmatpush2.msra.mxu0 0.0
      %692 = vmatprep.subr.mxu0 0.0
      %693 = vmatpush2.msra.mxu0 0.0
      %694 = vmatprep.subr.mxu0 0.0
      %695 = vmatpush2.msra.mxu0 0.0
      %696 = vmatprep.subr.mxu0 0.0
      %697 = vmatpush2.msra.mxu0 0.0
      %698 = vmatprep.subr.mxu0 0.0
      %699 = vmatpush2.msra.mxu0 0.0
      %700 = vmatprep.subr.mxu0 0.0
      %701 = vmatpush2.msra.mxu0 0.0
      %702 = vmatprep.subr.mxu0 0.0
      %703 = vmatpush2.msra.mxu0 0.0
      %704 = vmatprep.mubr.f32.mxu0 0.0
      %705 = vmatmul.mubr.f32.gmra.mxu0 %v638
      %v706 = vpop.f32.mrf.mxu0
      %v707 = vadd.f32 0.0, %v706
      %v708 = vpop.f32.mrf.mxu0
      %709 = vdwg.mxu0
      %v710 = vld [vmem:[#allocation4] sm:$0xff]
      %712 = vset.pattern.permute.xlu0 1
      %713 = vperm.xlu0 %712, %v616
      %v714 = vpop.permute.xlu0 %713
      %v716 = vmul.f32 %v714, %v710
      %718 = vrot.lane.b32.xlu0 %v707, 8
      %v719 = vpop.permute.xlu0 %718
      %v721 = vadd.f32 %v716, %v719
      %vm722 = vcmask 130112
      %723 = vst.msk [vmem:[#allocation4] sm:$0xff] %vm722, %v721
      %724 = vrot.lane.b32.xlu0 %v343, 112
      %v725 = vpop.permute.xlu0 %724
      %726 = vrot.lane.b32.xlu0 %v344, 112
      %v727 = vpop.permute.xlu0 %726
      %v728 = vsel %vm346, %v725, 0
      %v730 = vsel %vm346, %v727, 0
      %732 = vmatprep.subr.mxu0 0.0
      %733 = vmatpush1.xpose.msra.mxu0 0.0
      %734 = vmatprep.subr.mxu0 0.0
      %735 = vmatpush1.xpose.msra.mxu0 0.0
      %736 = vmatprep.subr.mxu0 0.0
      %737 = vmatpush1.xpose.msra.mxu0 0.0
      %738 = vmatprep.subr.mxu0 0.0
      %739 = vmatpush1.xpose.msra.mxu0 0.0
      %740 = vmatprep.subr.mxu0 0.0
      %741 = vmatpush1.xpose.msra.mxu0 0.0
      %742 = vmatprep.subr.mxu0 0.0
      %743 = vmatpush1.xpose.msra.mxu0 0.0
      %744 = vmatprep.subr.mxu0 0.0
      %745 = vmatpush1.xpose.msra.mxu0 0.0
      %746 = vmatprep.subr.mxu0 0.0
      %747 = vmatpush1.xpose.msra.mxu0 0.0
      %748 = vmatprep.subr.mxu0 0.0
      %749 = vmatpush1.xpose.msra.mxu0 0.0
      %750 = vmatprep.subr.mxu0 0.0
      %751 = vmatpush1.xpose.msra.mxu0 0.0
      %752 = vmatprep.subr.mxu0 0.0
      %753 = vmatpush1.xpose.msra.mxu0 0.0
      %754 = vmatprep.subr.mxu0 0.0
      %755 = vmatpush1.xpose.msra.mxu0 0.0
      %756 = vmatprep.subr.mxu0 0.0
      %757 = vmatpush1.xpose.msra.mxu0 0.0
      %758 = vmatprep.subr.mxu0 0.0
      %759 = vmatpush1.xpose.msra.mxu0 0.0
      %760 = vmatprep.subr.mxu0 0.0
      %761 = vmatpush1.xpose.msra.mxu0 0.0
      %762 = vmatprep.subr.mxu0 0.0
      %763 = vmatpush1.xpose.msra.mxu0 %v730
      %764 = vmatprep.subr.mxu0 0.0
      %765 = vmatpush2.xpose.msra.mxu0 0.0
      %766 = vmatprep.subr.mxu0 0.0
      %767 = vmatpush2.xpose.msra.mxu0 0.0
      %768 = vmatprep.subr.mxu0 0.0
      %769 = vmatpush2.xpose.msra.mxu0 0.0
      %770 = vmatprep.subr.mxu0 0.0
      %771 = vmatpush2.xpose.msra.mxu0 0.0
      %772 = vmatprep.subr.mxu0 0.0
      %773 = vmatpush2.xpose.msra.mxu0 0.0
      %774 = vmatprep.subr.mxu0 0.0
      %775 = vmatpush2.xpose.msra.mxu0 0.0
      %776 = vmatprep.subr.mxu0 0.0
      %777 = vmatpush2.xpose.msra.mxu0 0.0
      %778 = vmatprep.subr.mxu0 0.0
      %779 = vmatpush2.xpose.msra.mxu0 0.0
      %780 = vmatprep.subr.mxu0 0.0
      %781 = vmatpush2.xpose.msra.mxu0 0.0
      %782 = vmatprep.subr.mxu0 0.0
      %783 = vmatpush2.xpose.msra.mxu0 0.0
      %784 = vmatprep.subr.mxu0 0.0
      %785 = vmatpush2.xpose.msra.mxu0 0.0
      %786 = vmatprep.subr.mxu0 0.0
      %787 = vmatpush2.xpose.msra.mxu0 0.0
      %788 = vmatprep.subr.mxu0 0.0
      %789 = vmatpush2.xpose.msra.mxu0 0.0
      %790 = vmatprep.subr.mxu0 0.0
      %791 = vmatpush2.xpose.msra.mxu0 0.0
      %792 = vmatprep.subr.mxu0 0.0
      %793 = vmatpush2.xpose.msra.mxu0 0.0
      %794 = vmatprep.subr.mxu0 0.0
      %795 = vmatpush2.xpose.msra.mxu0 0.0
      %796 = vmatprep.mubr.f32.mxu0 0.0
      %797 = vmatmul.mubr.f32.gmra.mxu0 %v728
      %v798 = vpop.f32.mrf.mxu0
      %v799 = vadd.f32 %v341, %v798
      %v800 = vpop.f32.mrf.mxu0
      %801 = vdwg.mxu0
      %v802 = vld [vmem:[#allocation2] sm:$0xff]
      %v803 = vld [vmem:[#allocation3] sm:$0xff]
      %v804 = vsel %vm346, %v799, -inf
      %805 = vmax.xlane.f32.xlu0 %v804
      %v806 = vpop.xlane.xlu0 %805
      %v807 = vmax.f32 %v802, %v806
      %v808 = vsub.f32 %v802, %v807
      %v809 = vmul.f32 %v808, 1.442695
      %v810 = vpow.pop %v809
      %812 = vset.pattern.permute.xlu0 2
      %813 = vperm.xlu0 %812, %v807
      %v814 = vpop.permute.xlu0 %813
      %v816 = vsub.f32 %v799, %v814
      %v817 = vmul.f32 %v816, 1.442695
      %v818 = vpow.pop %v817
      %v819 = vmul.f32 %v810, %v803
      %v820 = vsel %vm346, %v818, 0.0
      %821 = vadd.xlane.f32.xlu0 %v820
      %v822 = vpop.xlane.xlu0 %821
      %v823 = vadd.f32 %v819, %v822
      %vm824 = vcmask 23568
      %825 = vst.msk [vmem:[#allocation3] sm:$0xff] %vm824, %v823
      %826 = vst.msk [vmem:[#allocation2] sm:$0xff] %vm824, %v807
      %827 = vrot.lane.b32.xlu0 %v345, 112
      %v828 = vpop.permute.xlu0 %827
      %v831 = vsel %vm346, %v818, 0
      %833 = vmatprep.subr.mxu0 0.0
      %834 = vmatpush1.msra.mxu0 0.0
      %835 = vmatprep.subr.mxu0 0.0
      %836 = vmatpush1.msra.mxu0 0.0
      %837 = vmatprep.subr.mxu0 0.0
      %838 = vmatpush1.msra.mxu0 0.0
      %839 = vmatprep.subr.mxu0 0.0
      %840 = vmatpush1.msra.mxu0 0.0
      %841 = vmatprep.subr.mxu0 0.0
      %842 = vmatpush1.msra.mxu0 0.0
      %843 = vmatprep.subr.mxu0 0.0
      %844 = vmatpush1.msra.mxu0 0.0
      %845 = vmatprep.subr.mxu0 0.0
      %846 = vmatpush1.msra.mxu0 0.0
      %847 = vmatprep.subr.mxu0 0.0
      %848 = vmatpush1.msra.mxu0 0.0
      %849 = vmatprep.subr.mxu0 0.0
      %850 = vmatpush1.msra.mxu0 0.0
      %851 = vmatprep.subr.mxu0 0.0
      %852 = vmatpush1.msra.mxu0 0.0
      %853 = vmatprep.subr.mxu0 0.0
      %854 = vmatpush1.msra.mxu0 0.0
      %855 = vmatprep.subr.mxu0 0.0
      %856 = vmatpush1.msra.mxu0 0.0
      %857 = vmatprep.subr.mxu0 0.0
      %858 = vmatpush1.msra.mxu0 0.0
      %859 = vmatprep.subr.mxu0 0.0
      %860 = vmatpush1.msra.mxu0 0.0
      %861 = vmatprep.subr.mxu0 0.0
      %862 = vmatpush1.msra.mxu0 0.0
      %863 = vmatprep.subr.mxu0 0.0
      %864 = vmatpush1.msra.mxu0 %v828
      %865 = vmatprep.subr.mxu0 0.0
      %866 = vmatpush2.msra.mxu0 0.0
      %867 = vmatprep.subr.mxu0 0.0
      %868 = vmatpush2.msra.mxu0 0.0
      %869 = vmatprep.subr.mxu0 0.0
      %870 = vmatpush2.msra.mxu0 0.0
      %871 = vmatprep.subr.mxu0 0.0
      %872 = vmatpush2.msra.mxu0 0.0
      %873 = vmatprep.subr.mxu0 0.0
      %874 = vmatpush2.msra.mxu0 0.0
      %875 = vmatprep.subr.mxu0 0.0
      %876 = vmatpush2.msra.mxu0 0.0
      %877 = vmatprep.subr.mxu0 0.0
      %878 = vmatpush2.msra.mxu0 0.0
      %879 = vmatprep.subr.mxu0 0.0
      %880 = vmatpush2.msra.mxu0 0.0
      %881 = vmatprep.subr.mxu0 0.0
      %882 = vmatpush2.msra.mxu0 0.0
      %883 = vmatprep.subr.mxu0 0.0
      %884 = vmatpush2.msra.mxu0 0.0
      %885 = vmatprep.subr.mxu0 0.0
      %886 = vmatpush2.msra.mxu0 0.0
      %887 = vmatprep.subr.mxu0 0.0
      %888 = vmatpush2.msra.mxu0 0.0
      %889 = vmatprep.subr.mxu0 0.0
      %890 = vmatpush2.msra.mxu0 0.0
      %891 = vmatprep.subr.mxu0 0.0
      %892 = vmatpush2.msra.mxu0 0.0
      %893 = vmatprep.subr.mxu0 0.0
      %894 = vmatpush2.msra.mxu0 0.0
      %895 = vmatprep.subr.mxu0 0.0
      %896 = vmatpush2.msra.mxu0 0.0
      %897 = vmatprep.mubr.f32.mxu0 0.0
      %898 = vmatmul.mubr.f32.gmra.mxu0 %v831
      %v899 = vpop.f32.mrf.mxu0
      %v900 = vadd.f32 0.0, %v899
      %v901 = vpop.f32.mrf.mxu0
      %902 = vdwg.mxu0
      %v903 = vld [vmem:[#allocation4] sm:$0xff]
      %905 = vset.pattern.permute.xlu0 2
      %906 = vperm.xlu0 %905, %v810
      %v907 = vpop.permute.xlu0 %906
      %v909 = vmul.f32 %v907, %v903
      %911 = vrot.lane.b32.xlu0 %v900, 16
      %v912 = vpop.permute.xlu0 %911
      %v914 = vadd.f32 %v909, %v912
      %vm915 = vcmask 195712
      %916 = vst.msk [vmem:[#allocation4] sm:$0xff] %vm915, %v914
      %917 = vrot.lane.b32.xlu0 %v343, 104
      %v918 = vpop.permute.xlu0 %917
      %919 = vrot.lane.b32.xlu0 %v344, 104
      %v920 = vpop.permute.xlu0 %919
      %v921 = vsel %vm346, %v918, 0
      %v923 = vsel %vm346, %v920, 0
      %925 = vmatprep.subr.mxu0 0.0
      %926 = vmatpush1.xpose.msra.mxu0 0.0
      %927 = vmatprep.subr.mxu0 0.0
      %928 = vmatpush1.xpose.msra.mxu0 0.0
      %929 = vmatprep.subr.mxu0 0.0
      %930 = vmatpush1.xpose.msra.mxu0 0.0
      %931 = vmatprep.subr.mxu0 0.0
      %932 = vmatpush1.xpose.msra.mxu0 0.0
      %933 = vmatprep.subr.mxu0 0.0
      %934 = vmatpush1.xpose.msra.mxu0 0.0
      %935 = vmatprep.subr.mxu0 0.0
      %936 = vmatpush1.xpose.msra.mxu0 0.0
      %937 = vmatprep.subr.mxu0 0.0
      %938 = vmatpush1.xpose.msra.mxu0 0.0
      %939 = vmatprep.subr.mxu0 0.0
      %940 = vmatpush1.xpose.msra.mxu0 0.0
      %941 = vmatprep.subr.mxu0 0.0
      %942 = vmatpush1.xpose.msra.mxu0 0.0
      %943 = vmatprep.subr.mxu0 0.0
      %944 = vmatpush1.xpose.msra.mxu0 0.0
      %945 = vmatprep.subr.mxu0 0.0
      %946 = vmatpush1.xpose.msra.mxu0 0.0
      %947 = vmatprep.subr.mxu0 0.0
      %948 = vmatpush1.xpose.msra.mxu0 0.0
      %949 = vmatprep.subr.mxu0 0.0
      %950 = vmatpush1.xpose.msra.mxu0 0.0
      %951 = vmatprep.subr.mxu0 0.0
      %952 = vmatpush1.xpose.msra.mxu0 0.0
      %953 = vmatprep.subr.mxu0 0.0
      %954 = vmatpush1.xpose.msra.mxu0 0.0
      %955 = vmatprep.subr.mxu0 0.0
      %956 = vmatpush1.xpose.msra.mxu0 %v923
      %957 = vmatprep.subr.mxu0 0.0
      %958 = vmatpush2.xpose.msra.mxu0 0.0
      %959 = vmatprep.subr.mxu0 0.0
      %960 = vmatpush2.xpose.msra.mxu0 0.0
      %961 = vmatprep.subr.mxu0 0.0
      %962 = vmatpush2.xpose.msra.mxu0 0.0
      %963 = vmatprep.subr.mxu0 0.0
      %964 = vmatpush2.xpose.msra.mxu0 0.0
      %965 = vmatprep.subr.mxu0 0.0
      %966 = vmatpush2.xpose.msra.mxu0 0.0
      %967 = vmatprep.subr.mxu0 0.0
      %968 = vmatpush2.xpose.msra.mxu0 0.0
      %969 = vmatprep.subr.mxu0 0.0
      %970 = vmatpush2.xpose.msra.mxu0 0.0
      %971 = vmatprep.subr.mxu0 0.0
      %972 = vmatpush2.xpose.msra.mxu0 0.0
      %973 = vmatprep.subr.mxu0 0.0
      %974 = vmatpush2.xpose.msra.mxu0 0.0
      %975 = vmatprep.subr.mxu0 0.0
      %976 = vmatpush2.xpose.msra.mxu0 0.0
      %977 = vmatprep.subr.mxu0 0.0
      %978 = vmatpush2.xpose.msra.mxu0 0.0
      %979 = vmatprep.subr.mxu0 0.0
      %980 = vmatpush2.xpose.msra.mxu0 0.0
      %981 = vmatprep.subr.mxu0 0.0
      %982 = vmatpush2.xpose.msra.mxu0 0.0
      %983 = vmatprep.subr.mxu0 0.0
      %984 = vmatpush2.xpose.msra.mxu0 0.0
      %985 = vmatprep.subr.mxu0 0.0
      %986 = vmatpush2.xpose.msra.mxu0 0.0
      %987 = vmatprep.subr.mxu0 0.0
      %988 = vmatpush2.xpose.msra.mxu0 0.0
      %989 = vmatprep.mubr.f32.mxu0 0.0
      %990 = vmatmul.mubr.f32.gmra.mxu0 %v921
      %v991 = vpop.f32.mrf.mxu0
      %v992 = vadd.f32 %v341, %v991
      %v993 = vpop.f32.mrf.mxu0
      %994 = vdwg.mxu0
      %v995 = vld [vmem:[#allocation2] sm:$0xff]
      %v996 = vld [vmem:[#allocation3] sm:$0xff]
      %v997 = vsel %vm346, %v992, -inf
      %998 = vmax.xlane.f32.xlu0 %v997
      %v999 = vpop.xlane.xlu0 %998
      %v1000 = vmax.f32 %v995, %v999
      %v1001 = vsub.f32 %v995, %v1000
      %v1002 = vmul.f32 %v1001, 1.442695
      %v1003 = vpow.pop %v1002
      %1005 = vset.pattern.permute.xlu0 3
      %1006 = vperm.xlu0 %1005, %v1000
      %v1007 = vpop.permute.xlu0 %1006
      %v1009 = vsub.f32 %v992, %v1007
      %v1010 = vmul.f32 %v1009, 1.442695
      %v1011 = vpow.pop %v1010
      %v1012 = vmul.f32 %v1003, %v996
      %v1013 = vsel %vm346, %v1011, 0.0
      %1014 = vadd.xlane.f32.xlu0 %v1013
      %v1015 = vpop.xlane.xlu0 %1014
      %v1016 = vadd.f32 %v1012, %v1015
      %vm1017 = vcmask 31768
      %1018 = vst.msk [vmem:[#allocation3] sm:$0xff] %vm1017, %v1016
      %1019 = vst.msk [vmem:[#allocation2] sm:$0xff] %vm1017, %v1000
      %1020 = vrot.lane.b32.xlu0 %v345, 104
      %v1021 = vpop.permute.xlu0 %1020
      %v1024 = vsel %vm346, %v1011, 0
      %1026 = vmatprep.subr.mxu0 0.0
      %1027 = vmatpush1.msra.mxu0 0.0
      %1028 = vmatprep.subr.mxu0 0.0
      %1029 = vmatpush1.msra.mxu0 0.0
      %1030 = vmatprep.subr.mxu0 0.0
      %1031 = vmatpush1.msra.mxu0 0.0
      %1032 = vmatprep.subr.mxu0 0.0
      %1033 = vmatpush1.msra.mxu0 0.0
      %1034 = vmatprep.subr.mxu0 0.0
      %1035 = vmatpush1.msra.mxu0 0.0
      %1036 = vmatprep.subr.mxu0 0.0
      %1037 = vmatpush1.msra.mxu0 0.0
      %1038 = vmatprep.subr.mxu0 0.0
      %1039 = vmatpush1.msra.mxu0 0.0
      %1040 = vmatprep.subr.mxu0 0.0
      %1041 = vmatpush1.msra.mxu0 0.0
      %1042 = vmatprep.subr.mxu0 0.0
      %1043 = vmatpush1.msra.mxu0 0.0
      %1044 = vmatprep.subr.mxu0 0.0
      %1045 = vmatpush1.msra.mxu0 0.0
      %1046 = vmatprep.subr.mxu0 0.0
      %1047 = vmatpush1.msra.mxu0 0.0
      %1048 = vmatprep.subr.mxu0 0.0
      %1049 = vmatpush1.msra.mxu0 0.0
      %1050 = vmatprep.subr.mxu0 0.0
      %1051 = vmatpush1.msra.mxu0 0.0
      %1052 = vmatprep.subr.mxu0 0.0
      %1053 = vmatpush1.msra.mxu0 0.0
      %1054 = vmatprep.subr.mxu0 0.0
      %1055 = vmatpush1.msra.mxu0 0.0
      %1056 = vmatprep.subr.mxu0 0.0
      %1057 = vmatpush1.msra.mxu0 %v1021
      %1058 = vmatprep.subr.mxu0 0.0
      %1059 = vmatpush2.msra.mxu0 0.0
      %1060 = vmatprep.subr.mxu0 0.0
      %1061 = vmatpush2.msra.mxu0 0.0
      %1062 = vmatprep.subr.mxu0 0.0
      %1063 = vmatpush2.msra.mxu0 0.0
      %1064 = vmatprep.subr.mxu0 0.0
      %1065 = vmatpush2.msra.mxu0 0.0
      %1066 = vmatprep.subr.mxu0 0.0
      %1067 = vmatpush2.msra.mxu0 0.0
      %1068 = vmatprep.subr.mxu0 0.0
      %1069 = vmatpush2.msra.mxu0 0.0
      %1070 = vmatprep.subr.mxu0 0.0
      %1071 = vmatpush2.msra.mxu0 0.0
      %1072 = vmatprep.subr.mxu0 0.0
      %1073 = vmatpush2.msra.mxu0 0.0
      %1074 = vmatprep.subr.mxu0 0.0
      %1075 = vmatpush2.msra.mxu0 0.0
      %1076 = vmatprep.subr.mxu0 0.0
      %1077 = vmatpush2.msra.mxu0 0.0
      %1078 = vmatprep.subr.mxu0 0.0
      %1079 = vmatpush2.msra.mxu0 0.0
      %1080 = vmatprep.subr.mxu0 0.0
      %1081 = vmatpush2.msra.mxu0 0.0
      %1082 = vmatprep.subr.mxu0 0.0
      %1083 = vmatpush2.msra.mxu0 0.0
      %1084 = vmatprep.subr.mxu0 0.0
      %1085 = vmatpush2.msra.mxu0 0.0
      %1086 = vmatprep.subr.mxu0 0.0
      %1087 = vmatpush2.msra.mxu0 0.0
      %1088 = vmatprep.subr.mxu0 0.0
      %1089 = vmatpush2.msra.mxu0 0.0
      %1090 = vmatprep.mubr.f32.mxu0 0.0
      %1091 = vmatmul.mubr.f32.gmra.mxu0 %v1024
      %v1092 = vpop.f32.mrf.mxu0
      %v1093 = vadd.f32 0.0, %v1092
      %v1094 = vpop.f32.mrf.mxu0
      %1095 = vdwg.mxu0
      %v1096 = vld [vmem:[#allocation4] sm:$0xff]
      %1098 = vset.pattern.permute.xlu0 3
      %1099 = vperm.xlu0 %1098, %v1003
      %v1100 = vpop.permute.xlu0 %1099
      %v1102 = vmul.f32 %v1100, %v1096
      %1104 = vrot.lane.b32.xlu0 %v1093, 24
      %v1105 = vpop.permute.xlu0 %1104
      %v1107 = vadd.f32 %v1102, %v1105
      %vm1108 = vcmask 261312
      %1109 = vst.msk [vmem:[#allocation4] sm:$0xff] %vm1108, %v1107
      // Predicated region
      $region41: #{transformer_prenorm_attention_block.6} parent=35 // pred_check
        %p1110 = pneg %p332
      $region42: #{transformer_prenorm_attention_block.6} parent=35 // pred_check_branch
        %1112 = sbr.rel (%p1110) target = $region44
      $region43: #{transformer_prenorm_attention_block.6} parent=35 // pred_region
        %v1113 = vld [vmem:[#allocation3] sm:$0xff]
        %v1114 = vrcp.pop %v1113
        %v1115 = vld [vmem:[#allocation4] sm:$0xff]
        %1117 = vset.pattern.permute.xlu0 0
        %1118 = vperm.xlu0 %1117, %v1114
        %v1119 = vpop.permute.xlu0 %1118
        %v1121 = vmul.f32 %v1115, %v1119
        %1122 = vst.msk [vmem:[%s331] sm:$0xff] %vm346, %v1121
        %v1123 = vld [vmem:[#allocation4] sm:$0xff]
        %1124 = vset.pattern.permute.xlu0 1
        %1125 = vperm.xlu0 %1124, %v1114
        %v1126 = vpop.permute.xlu0 %1125
        %v1128 = vmul.f32 %v1123, %v1126
        %1129 = vst.msk [vmem:[%s331] sm:$0xff] %vm722, %v1128
        %v1130 = vld [vmem:[#allocation4] sm:$0xff]
        %1131 = vset.pattern.permute.xlu0 2
        %1132 = vperm.xlu0 %1131, %v1114
        %v1133 = vpop.permute.xlu0 %1132
        %v1135 = vmul.f32 %v1130, %v1133
        %1136 = vst.msk [vmem:[%s331] sm:$0xff] %vm915, %v1135
        %v1137 = vld [vmem:[#allocation4] sm:$0xff]
        %1138 = vset.pattern.permute.xlu0 3
        %1139 = vperm.xlu0 %1138, %v1114
        %v1140 = vpop.permute.xlu0 %1139
        %v1142 = vmul.f32 %v1137, %v1140
        %1143 = vst.msk [vmem:[%s331] sm:$0xff] %vm1108, %v1142
      $region44: #{transformer_prenorm_attention_block.6} parent=35 // pred_fallthru
        _
      %p1144 = scmp.lt.s32.totalorder %s20, 1
      %s1145 = scalar_select %p1144, %s20, 1
      %p1146 = scmp.lt.s32.totalorder %s21, 0
      %s1147 = scalar_select %p1146, %s21, 0
      %s1148 = sadd.s32 %s1147, %s1145
      %s1149 = smul.addr %s1148, 8
      %s1150 = scalar_lea.vmem %s4, %s1149
      // Predicated region
      $region45: #{transformer_prenorm_attention_block.6} parent=35 // pred_check
        %p1151 = pneg %p168
      $region46: #{transformer_prenorm_attention_block.6} parent=35 // pred_check_branch
        %1153 = sbr.rel (%p1151) target = $region48
      $region47: #{transformer_prenorm_attention_block.6} parent=35 // pred_region
        _
      $region48: #{transformer_prenorm_attention_block.6} parent=35 // pred_fallthru
        _
    $region36: #{transformer_prenorm_attention_block.6} parent=5 // pred_fallthru
      _
    %p1154 = scmp.le.s32.totalorder 2, %s10
    // Predicated region
    $region49: #{transformer_prenorm_attention_block.6} parent=5 // pred_check
      %p1155 = pneg %p1154
    $region50: #{transformer_prenorm_attention_block.6} parent=5 // pred_check_branch
      %1157 = sbr.rel (%p1155) target = $region52
    $region51: #{transformer_prenorm_attention_block.6} parent=5 // pred_region
      %s1158 = ssub.s32 %s10, 2
      // Predicated region
      $region53: #{transformer_prenorm_attention_block.6} parent=51 // pred_check
        %p1159 = pneg %p174
      $region54: #{transformer_prenorm_attention_block.6} parent=51 // pred_check_branch
        %1161 = sbr.rel (%p1159) target = $region56
      $region55: #{transformer_prenorm_attention_block.6} parent=51 // pred_region
        %p1162 = scmp.lt.s32.totalorder %s23, 1
        %s1163 = scalar_select %p1162, %s23, 1
        %p1164 = scmp.lt.s32.totalorder %s24, 0
        %s1165 = scalar_select %p1164, %s24, 0
        %s1166 = sadd.s32 %s1165, %s1163
        %s1167 = smul.addr %s1166, 8
        %s1168 = scalar_lea.vmem %s4, %s1167
      $region56: #{transformer_prenorm_attention_block.6} parent=51 // pred_fallthru
        _
    $region52: #{transformer_prenorm_attention_block.6} parent=5 // pred_fallthru
      _
  $region6: #{transformer_prenorm_attention_block.6} parent=0 // loop_footer
    %s14 = sadd.s32 1, %s10
  $region7: #{transformer_prenorm_attention_block.6} parent=0 // loop_footer_branch
    %9 = sbr.rel target = $region3
  $region8: #{transformer_prenorm_attention_block.6} parent=0 // loop_exit
    _

</llo_original>
